<compile_context>
chip_gen: v7x
topology: tpu7x:2x2x1
jax: 0.10.0
libtpu: 0.0.40
codegen_flags: <defaults>
</compile_context>

<pallas_src>
import functools

import jax
import jax.numpy as jnp
from jax import lax
from jax.experimental import pallas as pl
from jax.experimental.pallas import tpu as pltpu

EPS = 1e-5  # default eps for nn.BatchNorm1d and nn.LayerNorm


def _round_up(x, m):
    return ((x + m - 1) // m) * m


def _cdiv(a, b):
    return (a + b - 1) // b


# --------------------------------------------------------------------------
# Fused kernel:
#   [small one-hots -> block-diag Linear(+BN)] & [desc -> Linear(+BN)] -> ReLU
#   -> joint LayerNorm (fused sum / sum-sq reductions) -> ReLU
#   -> Linear1(+BN) as two K-split bf16 dots -> ReLU
#   -> Linear2(+BN) -> ReLU
#   -> Linear3 (output lane-padded to a multiple of 128)
# --------------------------------------------------------------------------
def _fused_kernel(small_ref, desc_ref,
                  ws_ref, bs_ref, wd_ref, bd_ref,
                  lngs_ref, lnbs_ref, lngd_ref, lnbd_ref,
                  w1s_ref, w1d_ref, b1_ref,
                  w2_ref, b2_ref, w3_ref, b3_ref,
                  o_ref, *, inv_n):
    # Branch stage (eval-mode BN folded): two bf16 MXU dots, f32 accumulation.
    h_s = jnp.dot(small_ref[...], ws_ref[...],
                  preferred_element_type=jnp.float32) + bs_ref[...]
    h_d = jnp.dot(desc_ref[...], wd_ref[...],
                  preferred_element_type=jnp.float32) + bd_ref[...]
    h_s = jnp.maximum(h_s, 0.0)
    h_d = jnp.maximum(h_d, 0.0)

    # LayerNorm over the virtual concat [small | desc]: one sum and one
    # sum-of-squares pass per part, var = E[h^2] - mu^2.
    s = (jnp.sum(h_s, axis=-1, keepdims=True)
         + jnp.sum(h_d, axis=-1, keepdims=True))
    sq = (jnp.sum(h_s * h_s, axis=-1, keepdims=True)
          + jnp.sum(h_d * h_d, axis=-1, keepdims=True))
    mu = s * inv_n
    var = jnp.maximum(sq * inv_n - mu * mu, 0.0)
    inv = lax.rsqrt(var + EPS)

    y_s = jnp.maximum((h_s - mu) * inv * lngs_ref[...] + lnbs_ref[...], 0.0)
    y_d = jnp.maximum((h_d - mu) * inv * lngd_ref[...] + lnbd_ref[...], 0.0)

    # Combiner Linear 1 (+ folded BN): two dots, K axis split to match the
    # (reordered) small/desc column layout. Then ReLU.
    h1 = (jnp.dot(y_s.astype(jnp.bfloat16), w1s_ref[...],
                  preferred_element_type=jnp.float32)
          + jnp.dot(y_d.astype(jnp.bfloat16), w1d_ref[...],
                    preferred_element_type=jnp.float32)
          + b1_ref[...])
    h1 = jnp.maximum(h1, 0.0)

    # Combiner Linear 2 (+ folded BN) + ReLU.
    h2 = jnp.dot(h1.astype(jnp.bfloat16), w2_ref[...],
                 preferred_element_type=jnp.float32) + b2_ref[...]
    h2 = jnp.maximum(h2, 0.0)

    # Final Linear into a lane-dense (128-multiple) output slab.
    o_ref[...] = jnp.dot(h2.astype(jnp.bfloat16), w3_ref[...],
                         preferred_element_type=jnp.float32) + b3_ref[...]


def fused_forward(x_small, x_desc, params, *, batch_tile=1024):
    """Run the fused encoder.

    x_small: (batch, small_in_pad) bf16 -- concatenated & lane-padded one-hots.
    x_desc:  (batch, 384) bf16          -- sentence embedding.
    Returns a (batch, out_pad) f32 slab; caller slices the real columns.
    """
    (ws, bs, wd, bd, lngs, lnbs, lngd, lnbd,
     w1s, w1d, b1, w2, b2, w3, b3) = params
    batch = x_small.shape[0]
    small_in = x_small.shape[1]
    desc_in = x_desc.shape[1]
    out_pad = w3.shape[1]
    n_feat = ws.shape[1] + wd.shape[1]
    hidden = w1s.shape[1]
    mid = w2.shape[1]

    weights = (ws, bs, wd, bd, lngs, lnbs, lngd, lnbd,
               w1s, w1d, b1, w2, b2, w3, b3)
    weight_bytes = sum(int(a.size) * a.dtype.itemsize for a in weights)

    # Chip-aware VMEM cap: 75% of physical VMEM (headroom for Mosaic scratch).
    try:
        phys_vmem = int(pltpu.get_tpu_info().vmem_capacity_bytes)
    except Exception:
        phys_vmem = 64 << 20           # conservative (v7x-sized) fallback
    vmem_cap = (phys_vmem * 3) // 4

    def vmem_required(tb_):
        io = 2 * tb_ * ((small_in + desc_in) * 2 + out_pad * 4)  # dbl-buffered
        inter = 4 * tb_ * (2 * n_feat + hidden + mid + out_pad)  # f32 temps
        inter += inter // 2                                      # bf16 copies
        return 2 * weight_bytes + io + inter + (4 << 20)

    # Batch tile: as big as possible (fewer grid steps, lane-dense DMAs),
    # multiple of 16 for bf16 sublane packing, >=2 tiles when the batch allows
    # so v7x's two TensorCores both get work, and no over-padding of awkward
    # batch sizes.
    tile_align = 16
    n_tiles = max(1, _cdiv(batch, batch_tile))
    if batch >= 2 * tile_align:
        n_tiles = max(n_tiles, 2)
    tb = _round_up(_cdiv(batch, n_tiles), tile_align)
    while tb > tile_align and vmem_required(tb) > vmem_cap:
        tb = _round_up(tb // 2, tile_align)
    n_tiles = _cdiv(batch, tb)
    padded_batch = n_tiles * tb

    if padded_batch != batch:
        pad = padded_batch - batch
        # Padded rows are all-zero; they produce benign values and are sliced
        # off before any consumer sees them.
        x_small = jnp.pad(x_small, ((0, pad), (0, 0)))
        x_desc = jnp.pad(x_desc, ((0, pad), (0, 0)))

    def _const_spec(a):
        # Full-array block, resident across the whole (parallel) batch grid.
        return pl.BlockSpec(a.shape, lambda i: (0, 0))

    in_specs = [pl.BlockSpec((tb, small_in), lambda i: (i, 0)),
                pl.BlockSpec((tb, desc_in), lambda i: (i, 0))]
    in_specs += [_const_spec(a) for a in weights]
    out_spec = pl.BlockSpec((tb, out_pad), lambda i: (i, 0))

    vmem_limit = min(max(vmem_required(tb), 32 << 20), vmem_cap)

    kernel = functools.partial(_fused_kernel, inv_n=1.0 / float(n_feat))
    out = pl.pallas_call(
        kernel,
        out_shape=jax.ShapeDtypeStruct((padded_batch, out_pad), jnp.float32),
        grid=(n_tiles,),
        in_specs=in_specs,
        out_specs=out_spec,
        compiler_params=pltpu.CompilerParams(
            dimension_semantics=("parallel",),
            vmem_limit_bytes=int(vmem_limit)),
    )(x_small, x_desc, *weights)
    return out[:batch]


# --------------------------------------------------------------------------
# Parameter construction (deterministic, synthetic)
# --------------------------------------------------------------------------
def _make_linear(key, in_dim, out_dim):
    kw, kb = jax.random.split(key)
    bound = 1.0 / jnp.sqrt(jnp.float32(in_dim))
    w = jax.random.uniform(kw, (in_dim, out_dim), jnp.float32, -bound, bound)
    b = jax.random.uniform(kb, (1, out_dim), jnp.float32, -bound, bound)
    return w, b


def _make_bn(key, dim):
    kg, kb, km, kv = jax.random.split(key, 4)
    gamma = 1.0 + 0.1 * jax.random.normal(kg, (1, dim), jnp.float32)
    beta = 0.1 * jax.random.normal(kb, (1, dim), jnp.float32)
    mean = 0.1 * jax.random.normal(km, (1, dim), jnp.float32)
    var = 1.0 + 0.2 * jnp.abs(jax.random.normal(kv, (1, dim), jnp.float32))
    return gamma, beta, mean, var


def _make_ln(key, dim):
    kg, kb = jax.random.split(key)
    gamma = 1.0 + 0.1 * jax.random.normal(kg, (1, dim), jnp.float32)
    beta = 0.1 * jax.random.normal(kb, (1, dim), jnp.float32)
    return gamma, beta


def _make_branch(key, in_dim, out_dim):
    k1, k2 = jax.random.split(key)
    w, b = _make_linear(k1, in_dim, out_dim)
    g, beta, mean, var = _make_bn(k2, out_dim)
    return (w, b, g, beta, mean, var)


def _fold_bn(w, b, g, beta, mean, var):
    """Fold eval-mode BN (running stats) into the preceding Linear."""
    scale = g * jax.lax.rsqrt(var + EPS)          # (1, out)
    return w * scale, (b - mean) * scale + beta


# --------------------------------------------------------------------------
# Model
# --------------------------------------------------------------------------
class CB2CFMultiModalEncoderPallas:
    TEXT_EMBEDDING_DIM = 384

    def __init__(self, key, number_of_genres, number_of_actors,
                 number_of_directors, number_of_languages,
                 item_embedding_dim=64):
        # Inference only: BN folding and dropout==identity are valid solely in
        # eval mode (running statistics).
        self.training = False

        d = item_embedding_dim
        self.item_dim = d
        self.genres_dim = 2 * d
        self.actors_dim = 2 * d
        self.directors_dim = d
        self.time_dim = 3 * d
        self.language_dim = d
        self.description_dim = 2 * d
        self.combiner_in = (self.genres_dim + self.actors_dim +
                            self.directors_dim + self.time_dim +
                            self.language_dim + self.description_dim)
        self.combiner_hidden = 512

        keys = jax.random.split(key, 12)
        self.genres_p = _make_branch(keys[0], number_of_genres, self.genres_dim)
        self.actors_p = _make_branch(keys[1], number_of_actors, self.actors_dim)
        self.directors_p = _make_branch(keys[2], number_of_directors,
                                        self.directors_dim)
        self.time_p = _make_branch(keys[3], 1, self.time_dim)
        self.language_p = _make_branch(keys[4], number_of_languages,
                                       self.language_dim)
        self.description_p = _make_branch(keys[5], self.TEXT_EMBEDDING_DIM,
                                          self.description_dim)

        self.ln = _make_ln(keys[6], self.combiner_in)
        self.lin1 = _make_linear(keys[7], self.combiner_in, self.combiner_hidden)
        self.bn1 = _make_bn(keys[8], self.combiner_hidden)
        self.lin2 = _make_linear(keys[9], self.combiner_hidden, 3 * d)
        self.bn2 = _make_bn(keys[10], 3 * d)
        self.lin3 = _make_linear(keys[11], 3 * d, d)

        self._build_fused_params()

    def _build_fused_params(self):
        d = self.item_dim
        # Original branch-concat column layout (torch.cat order):
        #   [genres 2d | desc 2d | actors 2d | directors d | time 3d | lang d]
        # The kernel splits it into desc (columns [2d:4d]) and "small"
        # (everything else, relative order preserved); LN params and Linear1
        # rows are split/reordered at build time to match.
        small = [self.genres_p, self.actors_p, self.directors_p,
                 self.time_p, self.language_p]
        in_dims = [p[0].shape[0] for p in small]
        out_dims = [p[0].shape[1] for p in small]
        small_in = int(sum(in_dims))
        small_out = int(sum(out_dims))                  # 9d
        assert small_out + self.description_dim == self.combiner_in
        self.small_in_pad = _round_up(small_in, 128)    # lane-aligned input

        # Block-diagonal weight for the 5 small branches (BN folded), bf16.
        ws = jnp.zeros((self.small_in_pad, small_out), jnp.float32)
        biases = []
        row = col = 0
        for p, din, dout in zip(small, in_dims, out_dims):
            wf, bf = _fold_bn(*p)
            ws = ws.at[row:row + din, col:col + dout].set(wf)
            biases.append(bf)
            row += din
            col += dout
        ws_bf16 = ws.astype(jnp.bfloat16)
        bs = jnp.concatenate(biases, axis=1)            # (1, 9d) f32

        # Description branch (dense, BN folded).
        wd_f, bd = _fold_bn(*self.description_p)
        wd_bf16 = wd_f.astype(jnp.bfloat16)             # (384, 2d)

        # LayerNorm params, split into [small | desc] column groups.
        lng, lnb = self.ln
        lngd = lng[:, 2 * d:4 * d]
        lnbd = lnb[:, 2 * d:4 * d]
        lngs = jnp.concatenate([lng[:, :2 * d], lng[:, 4 * d:]], axis=1)
        lnbs = jnp.concatenate([lnb[:, :2 * d], lnb[:, 4 * d:]], axis=1)

        # Combiner: fold bn1 into lin1 and split its rows the same way.
        w1f, b1f = _fold_bn(self.lin1[0], self.lin1[1], *self.bn1)
        w1d = w1f[2 * d:4 * d, :].astype(jnp.bfloat16)
        w1s = jnp.concatenate([w1f[:2 * d, :], w1f[4 * d:, :]],
                              axis=0).astype(jnp.bfloat16)

        # Fold bn2 into lin2.
        w2f, b2f = _fold_bn(self.lin2[0], self.lin2[1], *self.bn2)
        w2_bf16 = w2f.astype(jnp.bfloat16)

        # Final Linear, output columns zero-padded to a multiple of 128.
        w3, b3 = self.lin3
        self.out_pad = _round_up(self.item_dim, 128)
        w3p = jnp.zeros((w3.shape[0], self.out_pad),
                        jnp.float32).at[:, :self.item_dim].set(w3)
        b3p = jnp.zeros((1, self.out_pad),
                        jnp.float32).at[:, :self.item_dim].set(b3)

        self.fused_params = (ws_bf16, bs, wd_bf16, bd,
                             lngs, lnbs, lngd, lnbd,
                             w1s, w1d, b1f,
                             w2_bf16, b2f,
                             w3p.astype(jnp.bfloat16), b3p)

    def __call__(self, genres, actors, directors, unix_release_time,
                 description_emb, language):
        assert not self.training, (
            "Pallas kernel folds BatchNorm running stats (eval mode only).")
        # Only the tiny one-hot modalities are concatenated host-side (~81
        # cols, padded to 128); the 384-wide description embedding goes to the
        # kernel directly, so the dominant stream makes a single HBM pass.
        x_small = jnp.concatenate(
            [genres, actors, directors, unix_release_time, language],
            axis=1).astype(jnp.float32)
        pad = self.small_in_pad - x_small.shape[1]
        if pad:
            x_small = jnp.pad(x_small, ((0, 0), (0, pad)))
        x_small = x_small.astype(jnp.bfloat16)
        x_desc = description_emb.astype(jnp.bfloat16)

        out = fused_forward(x_small, x_desc, self.fused_params)
        return out[:, :self.item_dim]

    # pure-JAX reference (unfused / unfolded f32 math) for correctness checking
    def reference(self, genres, actors, directors, unix_release_time,
                  description_emb, language):
        def branch(x, p):
            w, b, g, beta, mean, var = p
            h = x @ w + b
            h = (h - mean) / jnp.sqrt(var + EPS) * g + beta
            return jnp.maximum(h, 0.0)

        g = branch(genres, self.genres_p)
        a = branch(actors, self.actors_p)
        dr = branch(directors, self.directors_p)
        t = branch(unix_release_time, self.time_p)
        lg = branch(language, self.language_p)
        de = branch(description_emb, self.description_p)
        x = jnp.concatenate([g, de, a, dr, t, lg], axis=1)

        lng, lnb = self.ln
        mu = jnp.mean(x, axis=-1, keepdims=True)
        var = jnp.mean((x - mu) ** 2, axis=-1, keepdims=True)
        y = (x - mu) / jnp.sqrt(var + EPS) * lng + lnb
        y = jnp.maximum(y, 0.0)

        w1, b1 = self.lin1
        g1, be1, m1, v1 = self.bn1
        h1 = jnp.maximum((y @ w1 + b1 - m1) / jnp.sqrt(v1 + EPS) * g1 + be1, 0.0)
        w2, b2 = self.lin2
        g2, be2, m2, v2 = self.bn2
        h2 = jnp.maximum((h1 @ w2 + b2 - m2) / jnp.sqrt(v2 + EPS) * g2 + be2, 0.0)
        w3, b3 = self.lin3
        return h2 @ w3 + b3


# --------------------------------------------------------------------------
if __name__ == "__main__":
    key = jax.random.PRNGKey(0)
    k_model, k_in = jax.random.split(key)

    batch = 8
    number_of_genres = 16
    number_of_actors = 32
    number_of_directors = 24
    number_of_languages = 8
    item_embedding_dim = 32

    model = CB2CFMultiModalEncoderPallas(
        k_model, number_of_genres, number_of_actors, number_of_directors,
        number_of_languages, item_embedding_dim=item_embedding_dim)

    kg, ka, kd, kt, kl, ks = jax.random.split(k_in, 6)
    genres = (jax.random.uniform(kg, (batch, number_of_genres)) > 0.7).astype(jnp.float32)
    actors = (jax.random.uniform(ka, (batch, number_of_actors)) > 0.8).astype(jnp.float32)
    directors = (jax.random.uniform(kd, (batch, number_of_directors)) > 0.9).astype(jnp.float32)
    unix_release_time = jax.random.uniform(kt, (batch, 1), jnp.float32)
    language = (jax.random.uniform(kl, (batch, number_of_languages)) > 0.8).astype(jnp.float32)
    # precomputed sentence-transformer embedding (see TODO(synk) above)
    description_emb = jax.random.normal(ks, (batch, model.TEXT_EMBEDDING_DIM), jnp.float32)

    out = model(genres, actors, directors, unix_release_time,
                description_emb, language)
    out = jax.block_until_ready(out)

    ref = model.reference(genres, actors, directors, unix_release_time,
                          description_emb, language)
    assert out.shape == (batch, item_embedding_dim), out.shape
    err = float(jnp.max(jnp.abs(out - ref)))
    scale = float(jnp.max(jnp.abs(ref)))
    # bf16 matmul operands: tolerance relaxed vs the pure-f32 reference.
    assert err < 3e-2 * max(1.0, scale), (err, scale)

    print("KERNEL_OK")
</pallas_src>

<mosaic_0001>
module attributes {stable_mosaic.version = 11 : i64} {
  func.func @_fused_kernel(%arg0: i32, %arg1: memref<16x128xbf16, #tpu.memory_space<vmem>>, %arg2: memref<16x384xbf16, #tpu.memory_space<vmem>>, %arg3: memref<128x288xbf16, #tpu.memory_space<vmem>>, %arg4: memref<1x288xf32, #tpu.memory_space<vmem>>, %arg5: memref<384x64xbf16, #tpu.memory_space<vmem>>, %arg6: memref<1x64xf32, #tpu.memory_space<vmem>>, %arg7: memref<1x288xf32, #tpu.memory_space<vmem>>, %arg8: memref<1x288xf32, #tpu.memory_space<vmem>>, %arg9: memref<1x64xf32, #tpu.memory_space<vmem>>, %arg10: memref<1x64xf32, #tpu.memory_space<vmem>>, %arg11: memref<288x512xbf16, #tpu.memory_space<vmem>>, %arg12: memref<64x512xbf16, #tpu.memory_space<vmem>>, %arg13: memref<1x512xf32, #tpu.memory_space<vmem>>, %arg14: memref<512x96xbf16, #tpu.memory_space<vmem>>, %arg15: memref<1x96xf32, #tpu.memory_space<vmem>>, %arg16: memref<96x128xbf16, #tpu.memory_space<vmem>>, %arg17: memref<1x128xf32, #tpu.memory_space<vmem>>, %arg18: memref<16x128xf32, #tpu.memory_space<vmem>>) attributes {dimension_semantics = [#tpu.dimension_semantics<parallel>], iteration_bounds = array<i64: 1>, scalar_prefetch = 0 : i64, scratch_operands = 0 : i64, tpu.core_type = #tpu.core_type<tc>, window_params = [{transform_indices = @transform_0, window_bounds = array<i64: 16, 128>}, {transform_indices = @transform_1, window_bounds = array<i64: 16, 384>}, {pipeline_mode = #tpu.pipeline_mode<synchronous>, transform_indices = @transform_2, window_bounds = array<i64: 128, 288>}, {pipeline_mode = #tpu.pipeline_mode<synchronous>, transform_indices = @transform_3, window_bounds = array<i64: 1, 288>}, {pipeline_mode = #tpu.pipeline_mode<synchronous>, transform_indices = @transform_4, window_bounds = array<i64: 384, 64>}, {pipeline_mode = #tpu.pipeline_mode<synchronous>, transform_indices = @transform_5, window_bounds = array<i64: 1, 64>}, {pipeline_mode = #tpu.pipeline_mode<synchronous>, transform_indices = @transform_6, window_bounds = array<i64: 1, 288>}, {pipeline_mode = #tpu.pipeline_mode<synchronous>, transform_indices = @transform_7, window_bounds = array<i64: 1, 288>}, {pipeline_mode = #tpu.pipeline_mode<synchronous>, transform_indices = @transform_8, window_bounds = array<i64: 1, 64>}, {pipeline_mode = #tpu.pipeline_mode<synchronous>, transform_indices = @transform_9, window_bounds = array<i64: 1, 64>}, {pipeline_mode = #tpu.pipeline_mode<synchronous>, transform_indices = @transform_10, window_bounds = array<i64: 288, 512>}, {pipeline_mode = #tpu.pipeline_mode<synchronous>, transform_indices = @transform_11, window_bounds = array<i64: 64, 512>}, {pipeline_mode = #tpu.pipeline_mode<synchronous>, transform_indices = @transform_12, window_bounds = array<i64: 1, 512>}, {pipeline_mode = #tpu.pipeline_mode<synchronous>, transform_indices = @transform_13, window_bounds = array<i64: 512, 96>}, {pipeline_mode = #tpu.pipeline_mode<synchronous>, transform_indices = @transform_14, window_bounds = array<i64: 1, 96>}, {pipeline_mode = #tpu.pipeline_mode<synchronous>, transform_indices = @transform_15, window_bounds = array<i64: 96, 128>}, {pipeline_mode = #tpu.pipeline_mode<synchronous>, transform_indices = @transform_16, window_bounds = array<i64: 1, 128>}, {transform_indices = @transform_17, window_bounds = array<i64: 16, 128>}]} {
    %c0 = arith.constant 0 : index
    %c0_0 = arith.constant 0 : index
    %0 = vector.load %arg1[%c0, %c0_0] : memref<16x128xbf16, #tpu.memory_space<vmem>>, vector<16x128xbf16>
    %c0_1 = arith.constant 0 : index
    %c0_2 = arith.constant 0 : index
    %1 = vector.load %arg3[%c0_1, %c0_2] : memref<128x288xbf16, #tpu.memory_space<vmem>>, vector<128x288xbf16>
    %cst = arith.constant dense<0.000000e+00> : vector<16x288xf32>
    %2 = tpu.matmul %0, %1, %cst {dimension_numbers = #tpu.dot_dimension_numbers<[1], [0], [0], [1], [0, 0, 1, 1], [], []>} : vector<16x128xbf16>, vector<128x288xbf16>, vector<16x288xf32> -> vector<16x288xf32>
    %c0_3 = arith.constant 0 : index
    %c0_4 = arith.constant 0 : index
    %3 = vector.load %arg4[%c0_3, %c0_4] : memref<1x288xf32, #tpu.memory_space<vmem>>, vector<1x288xf32>
    %4 = vector.broadcast %3 : vector<1x288xf32> to vector<16x288xf32>
    %5 = arith.addf %2, %4 : vector<16x288xf32>
    %c0_5 = arith.constant 0 : index
    %c0_6 = arith.constant 0 : index
    %6 = vector.load %arg2[%c0_5, %c0_6] : memref<16x384xbf16, #tpu.memory_space<vmem>>, vector<16x384xbf16>
    %c0_7 = arith.constant 0 : index
    %c0_8 = arith.constant 0 : index
    %7 = vector.load %arg5[%c0_7, %c0_8] : memref<384x64xbf16, #tpu.memory_space<vmem>>, vector<384x64xbf16>
    %cst_9 = arith.constant dense<0.000000e+00> : vector<16x64xf32>
    %8 = tpu.matmul %6, %7, %cst_9 {dimension_numbers = #tpu.dot_dimension_numbers<[1], [0], [0], [1], [0, 0, 1, 1], [], []>} : vector<16x384xbf16>, vector<384x64xbf16>, vector<16x64xf32> -> vector<16x64xf32>
    %c0_10 = arith.constant 0 : index
    %c0_11 = arith.constant 0 : index
    %9 = vector.load %arg6[%c0_10, %c0_11] : memref<1x64xf32, #tpu.memory_space<vmem>>, vector<1x64xf32>
    %10 = vector.broadcast %9 : vector<1x64xf32> to vector<16x64xf32>
    %11 = arith.addf %8, %10 : vector<16x64xf32>
    %cst_12 = arith.constant 0.000000e+00 : f32
    %12 = vector.broadcast %cst_12 : f32 to vector<16x288xf32>
    %13 = arith.maximumf %5, %12 : vector<16x288xf32>
    %cst_13 = arith.constant 0.000000e+00 : f32
    %14 = vector.broadcast %cst_13 : f32 to vector<16x64xf32>
    %15 = arith.maximumf %11, %14 : vector<16x64xf32>
    %cst_14 = arith.constant dense<0.000000e+00> : vector<16xf32>
    %16 = vector.multi_reduction <add>, %13, %cst_14 [1] : vector<16x288xf32> to vector<16xf32>
    %17 = vector.shape_cast %16 : vector<16xf32> to vector<16x1xf32>
    %cst_15 = arith.constant dense<0.000000e+00> : vector<16xf32>
    %18 = vector.multi_reduction <add>, %15, %cst_15 [1] : vector<16x64xf32> to vector<16xf32>
    %19 = vector.shape_cast %18 : vector<16xf32> to vector<16x1xf32>
    %20 = arith.addf %17, %19 : vector<16x1xf32>
    %21 = arith.mulf %13, %13 : vector<16x288xf32>
    %cst_16 = arith.constant dense<0.000000e+00> : vector<16xf32>
    %22 = vector.multi_reduction <add>, %21, %cst_16 [1] : vector<16x288xf32> to vector<16xf32>
    %23 = vector.shape_cast %22 : vector<16xf32> to vector<16x1xf32>
    %24 = arith.mulf %15, %15 : vector<16x64xf32>
    %cst_17 = arith.constant dense<0.000000e+00> : vector<16xf32>
    %25 = vector.multi_reduction <add>, %24, %cst_17 [1] : vector<16x64xf32> to vector<16xf32>
    %26 = vector.shape_cast %25 : vector<16xf32> to vector<16x1xf32>
    %27 = arith.addf %23, %26 : vector<16x1xf32>
    %cst_18 = arith.constant 0.00284090918 : f32
    %28 = vector.broadcast %cst_18 : f32 to vector<16x1xf32>
    %29 = arith.mulf %20, %28 : vector<16x1xf32>
    %cst_19 = arith.constant 0.00284090918 : f32
    %30 = vector.broadcast %cst_19 : f32 to vector<16x1xf32>
    %31 = arith.mulf %27, %30 : vector<16x1xf32>
    %32 = arith.mulf %29, %29 : vector<16x1xf32>
    %33 = arith.subf %31, %32 : vector<16x1xf32>
    %cst_20 = arith.constant 0.000000e+00 : f32
    %34 = vector.broadcast %cst_20 : f32 to vector<16x1xf32>
    %35 = arith.maximumf %33, %34 : vector<16x1xf32>
    %cst_21 = arith.constant 9.99999974E-6 : f32
    %36 = vector.broadcast %cst_21 : f32 to vector<16x1xf32>
    %37 = arith.addf %35, %36 : vector<16x1xf32>
    %38 = math.rsqrt %37 : vector<16x1xf32>
    %39 = vector.broadcast %29 : vector<16x1xf32> to vector<16x288xf32>
    %40 = arith.subf %13, %39 : vector<16x288xf32>
    %41 = vector.broadcast %38 : vector<16x1xf32> to vector<16x288xf32>
    %42 = arith.mulf %40, %41 : vector<16x288xf32>
    %c0_22 = arith.constant 0 : index
    %c0_23 = arith.constant 0 : index
    %43 = vector.load %arg7[%c0_22, %c0_23] : memref<1x288xf32, #tpu.memory_space<vmem>>, vector<1x288xf32>
    %44 = vector.broadcast %43 : vector<1x288xf32> to vector<16x288xf32>
    %45 = arith.mulf %42, %44 : vector<16x288xf32>
    %c0_24 = arith.constant 0 : index
    %c0_25 = arith.constant 0 : index
    %46 = vector.load %arg8[%c0_24, %c0_25] : memref<1x288xf32, #tpu.memory_space<vmem>>, vector<1x288xf32>
    %47 = vector.broadcast %46 : vector<1x288xf32> to vector<16x288xf32>
    %48 = arith.addf %45, %47 : vector<16x288xf32>
    %cst_26 = arith.constant 0.000000e+00 : f32
    %49 = vector.broadcast %cst_26 : f32 to vector<16x288xf32>
    %50 = arith.maximumf %48, %49 : vector<16x288xf32>
    %51 = vector.broadcast %29 : vector<16x1xf32> to vector<16x64xf32>
    %52 = arith.subf %15, %51 : vector<16x64xf32>
    %53 = vector.broadcast %38 : vector<16x1xf32> to vector<16x64xf32>
    %54 = arith.mulf %52, %53 : vector<16x64xf32>
    %c0_27 = arith.constant 0 : index
    %c0_28 = arith.constant 0 : index
    %55 = vector.load %arg9[%c0_27, %c0_28] : memref<1x64xf32, #tpu.memory_space<vmem>>, vector<1x64xf32>
    %56 = vector.broadcast %55 : vector<1x64xf32> to vector<16x64xf32>
    %57 = arith.mulf %54, %56 : vector<16x64xf32>
    %c0_29 = arith.constant 0 : index
    %c0_30 = arith.constant 0 : index
    %58 = vector.load %arg10[%c0_29, %c0_30] : memref<1x64xf32, #tpu.memory_space<vmem>>, vector<1x64xf32>
    %59 = vector.broadcast %58 : vector<1x64xf32> to vector<16x64xf32>
    %60 = arith.addf %57, %59 : vector<16x64xf32>
    %cst_31 = arith.constant 0.000000e+00 : f32
    %61 = vector.broadcast %cst_31 : f32 to vector<16x64xf32>
    %62 = arith.maximumf %60, %61 : vector<16x64xf32>
    %63 = arith.truncf %50 : vector<16x288xf32> to vector<16x288xbf16>
    %c0_32 = arith.constant 0 : index
    %c0_33 = arith.constant 0 : index
    %64 = vector.load %arg11[%c0_32, %c0_33] : memref<288x512xbf16, #tpu.memory_space<vmem>>, vector<288x512xbf16>
    %cst_34 = arith.constant dense<0.000000e+00> : vector<16x512xf32>
    %65 = tpu.matmul %63, %64, %cst_34 {dimension_numbers = #tpu.dot_dimension_numbers<[1], [0], [0], [1], [0, 0, 1, 1], [], []>} : vector<16x288xbf16>, vector<288x512xbf16>, vector<16x512xf32> -> vector<16x512xf32>
    %66 = arith.truncf %62 : vector<16x64xf32> to vector<16x64xbf16>
    %c0_35 = arith.constant 0 : index
    %c0_36 = arith.constant 0 : index
    %67 = vector.load %arg12[%c0_35, %c0_36] : memref<64x512xbf16, #tpu.memory_space<vmem>>, vector<64x512xbf16>
    %cst_37 = arith.constant dense<0.000000e+00> : vector<16x512xf32>
    %68 = tpu.matmul %66, %67, %cst_37 {dimension_numbers = #tpu.dot_dimension_numbers<[1], [0], [0], [1], [0, 0, 1, 1], [], []>} : vector<16x64xbf16>, vector<64x512xbf16>, vector<16x512xf32> -> vector<16x512xf32>
    %69 = arith.addf %65, %68 : vector<16x512xf32>
    %c0_38 = arith.constant 0 : index
    %c0_39 = arith.constant 0 : index
    %70 = vector.load %arg13[%c0_38, %c0_39] : memref<1x512xf32, #tpu.memory_space<vmem>>, vector<1x512xf32>
    %71 = vector.broadcast %70 : vector<1x512xf32> to vector<16x512xf32>
    %72 = arith.addf %69, %71 : vector<16x512xf32>
    %cst_40 = arith.constant 0.000000e+00 : f32
    %73 = vector.broadcast %cst_40 : f32 to vector<16x512xf32>
    %74 = arith.maximumf %72, %73 : vector<16x512xf32>
    %75 = arith.truncf %74 : vector<16x512xf32> to vector<16x512xbf16>
    %c0_41 = arith.constant 0 : index
    %c0_42 = arith.constant 0 : index
    %76 = vector.load %arg14[%c0_41, %c0_42] : memref<512x96xbf16, #tpu.memory_space<vmem>>, vector<512x96xbf16>
    %cst_43 = arith.constant dense<0.000000e+00> : vector<16x96xf32>
    %77 = tpu.matmul %75, %76, %cst_43 {dimension_numbers = #tpu.dot_dimension_numbers<[1], [0], [0], [1], [0, 0, 1, 1], [], []>} : vector<16x512xbf16>, vector<512x96xbf16>, vector<16x96xf32> -> vector<16x96xf32>
    %c0_44 = arith.constant 0 : index
    %c0_45 = arith.constant 0 : index
    %78 = vector.load %arg15[%c0_44, %c0_45] : memref<1x96xf32, #tpu.memory_space<vmem>>, vector<1x96xf32>
    %79 = vector.broadcast %78 : vector<1x96xf32> to vector<16x96xf32>
    %80 = arith.addf %77, %79 : vector<16x96xf32>
    %cst_46 = arith.constant 0.000000e+00 : f32
    %81 = vector.broadcast %cst_46 : f32 to vector<16x96xf32>
    %82 = arith.maximumf %80, %81 : vector<16x96xf32>
    %83 = arith.truncf %82 : vector<16x96xf32> to vector<16x96xbf16>
    %c0_47 = arith.constant 0 : index
    %c0_48 = arith.constant 0 : index
    %84 = vector.load %arg16[%c0_47, %c0_48] : memref<96x128xbf16, #tpu.memory_space<vmem>>, vector<96x128xbf16>
    %cst_49 = arith.constant dense<0.000000e+00> : vector<16x128xf32>
    %85 = tpu.matmul %83, %84, %cst_49 {dimension_numbers = #tpu.dot_dimension_numbers<[1], [0], [0], [1], [0, 0, 1, 1], [], []>} : vector<16x96xbf16>, vector<96x128xbf16>, vector<16x128xf32> -> vector<16x128xf32>
    %c0_50 = arith.constant 0 : index
    %c0_51 = arith.constant 0 : index
    %86 = vector.load %arg17[%c0_50, %c0_51] : memref<1x128xf32, #tpu.memory_space<vmem>>, vector<1x128xf32>
    %87 = vector.broadcast %86 : vector<1x128xf32> to vector<16x128xf32>
    %88 = arith.addf %85, %87 : vector<16x128xf32>
    %c0_52 = arith.constant 0 : index
    %c0_53 = arith.constant 0 : index
    %89 = vector.load %arg18[%c0_52, %c0_53] : memref<16x128xf32, #tpu.memory_space<vmem>>, vector<16x128xf32>
    tpu.vector_store %arg18[%c0_52, %c0_53], %88 {strides = array<i32>} : memref<16x128xf32, #tpu.memory_space<vmem>>, vector<16x128xf32>,
    return
  }
  func.func @transform_0(%arg0: i32) -> (i32, i32) {
    %c0_i32 = arith.constant 0 : i32
    %c0_i32_0 = arith.constant 0 : i32
    return %arg0, %c0_i32 : i32, i32
  }
  func.func @transform_1(%arg0: i32) -> (i32, i32) {
    %c0_i32 = arith.constant 0 : i32
    %c0_i32_0 = arith.constant 0 : i32
    return %arg0, %c0_i32 : i32, i32
  }
  func.func @transform_2(%arg0: i32) -> (i32, i32) {
    %c0_i32 = arith.constant 0 : i32
    %c0_i32_0 = arith.constant 0 : i32
    %c0_i32_1 = arith.constant 0 : i32
    return %c0_i32, %c0_i32_0 : i32, i32
  }
  func.func @transform_3(%arg0: i32) -> (i32, i32) {
    %c0_i32 = arith.constant 0 : i32
    %c0_i32_0 = arith.constant 0 : i32
    %c0_i32_1 = arith.constant 0 : i32
    return %c0_i32, %c0_i32_0 : i32, i32
  }
  func.func @transform_4(%arg0: i32) -> (i32, i32) {
    %c0_i32 = arith.constant 0 : i32
    %c0_i32_0 = arith.constant 0 : i32
    %c0_i32_1 = arith.constant 0 : i32
    return %c0_i32, %c0_i32_0 : i32, i32
  }
  func.func @transform_5(%arg0: i32) -> (i32, i32) {
    %c0_i32 = arith.constant 0 : i32
    %c0_i32_0 = arith.constant 0 : i32
    %c0_i32_1 = arith.constant 0 : i32
    return %c0_i32, %c0_i32_0 : i32, i32
  }
  func.func @transform_6(%arg0: i32) -> (i32, i32) {
    %c0_i32 = arith.constant 0 : i32
    %c0_i32_0 = arith.constant 0 : i32
    %c0_i32_1 = arith.constant 0 : i32
    return %c0_i32, %c0_i32_0 : i32, i32
  }
  func.func @transform_7(%arg0: i32) -> (i32, i32) {
    %c0_i32 = arith.constant 0 : i32
    %c0_i32_0 = arith.constant 0 : i32
    %c0_i32_1 = arith.constant 0 : i32
    return %c0_i32, %c0_i32_0 : i32, i32
  }
  func.func @transform_8(%arg0: i32) -> (i32, i32) {
    %c0_i32 = arith.constant 0 : i32
    %c0_i32_0 = arith.constant 0 : i32
    %c0_i32_1 = arith.constant 0 : i32
    return %c0_i32, %c0_i32_0 : i32, i32
  }
  func.func @transform_9(%arg0: i32) -> (i32, i32) {
    %c0_i32 = arith.constant 0 : i32
    %c0_i32_0 = arith.constant 0 : i32
    %c0_i32_1 = arith.constant 0 : i32
    return %c0_i32, %c0_i32_0 : i32, i32
  }
  func.func @transform_10(%arg0: i32) -> (i32, i32) {
    %c0_i32 = arith.constant 0 : i32
    %c0_i32_0 = arith.constant 0 : i32
    %c0_i32_1 = arith.constant 0 : i32
    return %c0_i32, %c0_i32_0 : i32, i32
  }
  func.func @transform_11(%arg0: i32) -> (i32, i32) {
    %c0_i32 = arith.constant 0 : i32
    %c0_i32_0 = arith.constant 0 : i32
    %c0_i32_1 = arith.constant 0 : i32
    return %c0_i32, %c0_i32_0 : i32, i32
  }
  func.func @transform_12(%arg0: i32) -> (i32, i32) {
    %c0_i32 = arith.constant 0 : i32
    %c0_i32_0 = arith.constant 0 : i32
    %c0_i32_1 = arith.constant 0 : i32
    return %c0_i32, %c0_i32_0 : i32, i32
  }
  func.func @transform_13(%arg0: i32) -> (i32, i32) {
    %c0_i32 = arith.constant 0 : i32
    %c0_i32_0 = arith.constant 0 : i32
    %c0_i32_1 = arith.constant 0 : i32
    return %c0_i32, %c0_i32_0 : i32, i32
  }
  func.func @transform_14(%arg0: i32) -> (i32, i32) {
    %c0_i32 = arith.constant 0 : i32
    %c0_i32_0 = arith.constant 0 : i32
    %c0_i32_1 = arith.constant 0 : i32
    return %c0_i32, %c0_i32_0 : i32, i32
  }
  func.func @transform_15(%arg0: i32) -> (i32, i32) {
    %c0_i32 = arith.constant 0 : i32
    %c0_i32_0 = arith.constant 0 : i32
    %c0_i32_1 = arith.constant 0 : i32
    return %c0_i32, %c0_i32_0 : i32, i32
  }
  func.func @transform_16(%arg0: i32) -> (i32, i32) {
    %c0_i32 = arith.constant 0 : i32
    %c0_i32_0 = arith.constant 0 : i32
    %c0_i32_1 = arith.constant 0 : i32
    return %c0_i32, %c0_i32_0 : i32, i32
  }
  func.func @transform_17(%arg0: i32) -> (i32, i32) {
    %c0_i32 = arith.constant 0 : i32
    %c0_i32_0 = arith.constant 0 : i32
    return %arg0, %c0_i32 : i32, i32
  }
}

</mosaic_0001>

<llo_original>
// kernel: tpu_custom_call.1
$region0: #{tpu_custom_call.1}
  #allocation0 [shape = 'u32[]', space=smem, size = 0x4, offset = 0x4, fixed_abs, tag = 'smem constant byte address 0x4 - core index']
  #allocation1 [shape = 'u32[144,128]{1,0:T(1,128)}', space=vmem, size = 0x12000, scoped, tag = 'internal scratch']
  %s0 = inlined_call_operand.vmem [shape: bf16[16,128], index: 0, kind: input, shape index: {}]
  %s1 = inlined_call_operand.vmem [shape: bf16[16,384], index: 1, kind: input, shape index: {}]
  %s2 = inlined_call_operand.vmem [shape: bf16[128,288], index: 2, kind: input, shape index: {}]
  %s3 = inlined_call_operand.vmem [shape: f32[1,288], index: 3, kind: input, shape index: {}]
  %s4 = inlined_call_operand.vmem [shape: bf16[384,64], index: 4, kind: input, shape index: {}]
  %s5 = inlined_call_operand.vmem [shape: f32[1,64], index: 5, kind: input, shape index: {}]
  %s6 = inlined_call_operand.vmem [shape: f32[1,288], index: 6, kind: input, shape index: {}]
  %s7 = inlined_call_operand.vmem [shape: f32[1,288], index: 7, kind: input, shape index: {}]
  %s8 = inlined_call_operand.vmem [shape: f32[1,64], index: 8, kind: input, shape index: {}]
  %s9 = inlined_call_operand.vmem [shape: f32[1,64], index: 9, kind: input, shape index: {}]
  %s10 = inlined_call_operand.vmem [shape: bf16[288,512], index: 10, kind: input, shape index: {}]
  %s11 = inlined_call_operand.vmem [shape: bf16[64,512], index: 11, kind: input, shape index: {}]
  %s12 = inlined_call_operand.vmem [shape: f32[1,512], index: 12, kind: input, shape index: {}]
  %s13 = inlined_call_operand.vmem [shape: bf16[512,96], index: 13, kind: input, shape index: {}]
  %s14 = inlined_call_operand.vmem [shape: f32[1,96], index: 14, kind: input, shape index: {}]
  %s15 = inlined_call_operand.vmem [shape: bf16[96,128], index: 15, kind: input, shape index: {}]
  %s16 = inlined_call_operand.vmem [shape: f32[1,128], index: 16, kind: input, shape index: {}]
  %s17 = inlined_call_operand.hbm [shape: f32[16,128], index: 17, kind: output, shape index: {}]
  %s18 = sld [smem:[#allocation0]]
  $region78: #{tpu_custom_call.1} parent=0
    _
  %s20 = ssub.s32 1, %s18
  %s21 = scalar_select 0, %s20, %s18
  $region1: #{tpu_custom_call.1} parent=0
    #allocation2 [shape = 'u8[8192]{0}', space=vmem, size = 0x2000, scoped, tag = 'output window, operand 0, single buffered']
    #allocation3 [shape = 's32[1]{0}', space=sflag, size = 0x4, scoped, tag = 'scoped memory for tpu_custom_call.1']
    %22 = vsyncpa [#allocation3], 0
    // Predicated region
    $region2: #{tpu_custom_call.1} parent=1 // pred_check
      _
    $region3: #{tpu_custom_call.1} parent=1 // pred_check_branch
      %24 = sbr.rel (0) target = $region5
    $region4: #{tpu_custom_call.1} parent=1 // pred_region
      _
    $region5: #{tpu_custom_call.1} parent=1 // pred_fallthru
      _
    // Predicated region
    $region6: #{tpu_custom_call.1} parent=1 // pred_check
      _
    $region7: #{tpu_custom_call.1} parent=1 // pred_check_branch
      %26 = sbr.rel (0) target = $region9
    $region8: #{tpu_custom_call.1} parent=1 // pred_region
      _
    $region9: #{tpu_custom_call.1} parent=1 // pred_fallthru
      _
    // Predicated region
    $region10: #{tpu_custom_call.1} parent=1 // pred_check
      _
    $region11: #{tpu_custom_call.1} parent=1 // pred_check_branch
      %28 = sbr.rel (0) target = $region13
    $region12: #{tpu_custom_call.1} parent=1 // pred_region
      _
    $region13: #{tpu_custom_call.1} parent=1 // pred_fallthru
      _
    // Predicated region
    $region14: #{tpu_custom_call.1} parent=1 // pred_check
      _
    $region15: #{tpu_custom_call.1} parent=1 // pred_check_branch
      %30 = sbr.rel (0) target = $region17
    $region16: #{tpu_custom_call.1} parent=1 // pred_region
      _
    $region17: #{tpu_custom_call.1} parent=1 // pred_fallthru
      _
    // Predicated region
    $region18: #{tpu_custom_call.1} parent=1 // pred_check
      _
    $region19: #{tpu_custom_call.1} parent=1 // pred_check_branch
      %32 = sbr.rel (0) target = $region21
    $region20: #{tpu_custom_call.1} parent=1 // pred_region
      _
    $region21: #{tpu_custom_call.1} parent=1 // pred_fallthru
      _
    // Predicated region
    $region22: #{tpu_custom_call.1} parent=1 // pred_check
      _
    $region23: #{tpu_custom_call.1} parent=1 // pred_check_branch
      %34 = sbr.rel (0) target = $region25
    $region24: #{tpu_custom_call.1} parent=1 // pred_region
      _
    $region25: #{tpu_custom_call.1} parent=1 // pred_fallthru
      _
    // Predicated region
    $region26: #{tpu_custom_call.1} parent=1 // pred_check
      _
    $region27: #{tpu_custom_call.1} parent=1 // pred_check_branch
      %36 = sbr.rel (0) target = $region29
    $region28: #{tpu_custom_call.1} parent=1 // pred_region
      _
    $region29: #{tpu_custom_call.1} parent=1 // pred_fallthru
      _
    // Predicated region
    $region30: #{tpu_custom_call.1} parent=1 // pred_check
      _
    $region31: #{tpu_custom_call.1} parent=1 // pred_check_branch
      %38 = sbr.rel (0) target = $region33
    $region32: #{tpu_custom_call.1} parent=1 // pred_region
      _
    $region33: #{tpu_custom_call.1} parent=1 // pred_fallthru
      _
    // Predicated region
    $region34: #{tpu_custom_call.1} parent=1 // pred_check
      _
    $region35: #{tpu_custom_call.1} parent=1 // pred_check_branch
      %40 = sbr.rel (0) target = $region37
    $region36: #{tpu_custom_call.1} parent=1 // pred_region
      _
    $region37: #{tpu_custom_call.1} parent=1 // pred_fallthru
      _
    // Predicated region
    $region38: #{tpu_custom_call.1} parent=1 // pred_check
      _
    $region39: #{tpu_custom_call.1} parent=1 // pred_check_branch
      %42 = sbr.rel (0) target = $region41
    $region40: #{tpu_custom_call.1} parent=1 // pred_region
      _
    $region41: #{tpu_custom_call.1} parent=1 // pred_fallthru
      _
    // Predicated region
    $region42: #{tpu_custom_call.1} parent=1 // pred_check
      _
    $region43: #{tpu_custom_call.1} parent=1 // pred_check_branch
      %44 = sbr.rel (0) target = $region45
    $region44: #{tpu_custom_call.1} parent=1 // pred_region
      _
    $region45: #{tpu_custom_call.1} parent=1 // pred_fallthru
      _
    // Predicated region
    $region46: #{tpu_custom_call.1} parent=1 // pred_check
      _
    $region47: #{tpu_custom_call.1} parent=1 // pred_check_branch
      %46 = sbr.rel (0) target = $region49
    $region48: #{tpu_custom_call.1} parent=1 // pred_region
      _
    $region49: #{tpu_custom_call.1} parent=1 // pred_fallthru
      _
    // Predicated region
    $region50: #{tpu_custom_call.1} parent=1 // pred_check
      _
    $region51: #{tpu_custom_call.1} parent=1 // pred_check_branch
      %48 = sbr.rel (0) target = $region53
    $region52: #{tpu_custom_call.1} parent=1 // pred_region
      _
    $region53: #{tpu_custom_call.1} parent=1 // pred_fallthru
      _
    // Predicated region
    $region54: #{tpu_custom_call.1} parent=1 // pred_check
      _
    $region55: #{tpu_custom_call.1} parent=1 // pred_check_branch
      %50 = sbr.rel (0) target = $region57
    $region56: #{tpu_custom_call.1} parent=1 // pred_region
      _
    $region57: #{tpu_custom_call.1} parent=1 // pred_fallthru
      _
    // Predicated region
    $region58: #{tpu_custom_call.1} parent=1 // pred_check
      _
    $region59: #{tpu_custom_call.1} parent=1 // pred_check_branch
      %52 = sbr.rel (0) target = $region61
    $region60: #{tpu_custom_call.1} parent=1 // pred_region
      _
    $region61: #{tpu_custom_call.1} parent=1 // pred_fallthru
      _
    // Predicated region
    $region62: #{tpu_custom_call.1} parent=1 // pred_check
      _
    $region63: #{tpu_custom_call.1} parent=1 // pred_check_branch
      %54 = sbr.rel (0) target = $region65
    $region64: #{tpu_custom_call.1} parent=1 // pred_region
      _
    $region65: #{tpu_custom_call.1} parent=1 // pred_fallthru
      _
    // Predicated region
    $region66: #{tpu_custom_call.1} parent=1 // pred_check
      _
    $region67: #{tpu_custom_call.1} parent=1 // pred_check_branch
      %56 = sbr.rel (0) target = $region69
    $region68: #{tpu_custom_call.1} parent=1 // pred_region
      _
    $region69: #{tpu_custom_call.1} parent=1 // pred_fallthru
      _
    %v58 = vld [vmem:[%s0] sm:$0xf]
    %v59 = vld [vmem:[%s0 + $0x4] sm:$0xf]
    %v60 = vld [vmem:[%s2] sm:$0xff]
    %v61 = vld [vmem:[%s2 + $0x8] sm:$0xf]
    %v62 = vld [vmem:[%s2 + $0xc] sm:$0xff]
    %v63 = vld [vmem:[%s2 + $0x14] sm:$0xf]
    %v64 = vld [vmem:[%s2 + $0x18] sm:$0xff]
    %v65 = vld [vmem:[%s2 + $0x20] sm:$0xf]
    %v66 = vld [vmem:[%s2 + $0x24] sm:$0xff]
    %v67 = vld [vmem:[%s2 + $0x2c] sm:$0xf]
    %v68 = vld [vmem:[%s2 + $0x30] sm:$0xff]
    %v69 = vld [vmem:[%s2 + $0x38] sm:$0xf]
    %v70 = vld [vmem:[%s2 + $0x3c] sm:$0xff]
    %v71 = vld [vmem:[%s2 + $0x44] sm:$0xf]
    %v72 = vld [vmem:[%s2 + $0x48] sm:$0xff]
    %v73 = vld [vmem:[%s2 + $0x50] sm:$0xf]
    %v74 = vld [vmem:[%s2 + $0x54] sm:$0xff]
    %v75 = vld [vmem:[%s2 + $0x5c] sm:$0xf]
    %v76 = vld [vmem:[%s2 + $0x60] sm:$0xff]
    %v77 = vld [vmem:[%s2 + $0x68] sm:$0xf]
    %v78 = vld [vmem:[%s2 + $0x6c] sm:$0xff]
    %v79 = vld [vmem:[%s2 + $0x74] sm:$0xf]
    %v80 = vld [vmem:[%s2 + $0x78] sm:$0xff]
    %v81 = vld [vmem:[%s2 + $0x80] sm:$0xf]
    %v82 = vld [vmem:[%s2 + $0x84] sm:$0xff]
    %v83 = vld [vmem:[%s2 + $0x8c] sm:$0xf]
    %v84 = vld [vmem:[%s2 + $0x90] sm:$0xff]
    %v85 = vld [vmem:[%s2 + $0x98] sm:$0xf]
    %v86 = vld [vmem:[%s2 + $0x9c] sm:$0xff]
    %v87 = vld [vmem:[%s2 + $0xa4] sm:$0xf]
    %v88 = vld [vmem:[%s2 + $0xa8] sm:$0xff]
    %v89 = vld [vmem:[%s2 + $0xb0] sm:$0xf]
    %v90 = vld [vmem:[%s2 + $0xb4] sm:$0xff]
    %v91 = vld [vmem:[%s2 + $0xbc] sm:$0xf]
    %v92 = vld [vmem:[%s3] sm:$0x7]
    %v94 = vlaneseq
    %v95 = vshrl.u32 %v94, 7
    %v96 = vsub.s32 0, %v95
    %v97 = vrot.slane %v92, %v96
    %v98 = vlaneseq
    %v99 = vshrl.u32 %v98, 7
    %v100 = vsub.s32 1, %v99
    %v101 = vrot.slane %v92, %v100
    %v102 = vlaneseq
    %v103 = vshrl.u32 %v102, 7
    %v104 = vsub.s32 2, %v103
    %v105 = vrot.slane %v92, %v104
    %v111 = vunpack.c.l.b16 %v58
    %v112 = vunpack.c.l.b16 %v59
    %v113 = vpack.c.b16 %v112, %v111
    %v147 = vunpack.c.l.b16 %v60
    %v148 = vunpack.c.h.b16 %v60
    %v149 = vunpack.c.l.b16 %v61
    %v150 = vunpack.c.l.b16 %v62
    %v151 = vunpack.c.h.b16 %v62
    %v152 = vunpack.c.l.b16 %v63
    %v153 = vunpack.c.l.b16 %v64
    %v154 = vunpack.c.h.b16 %v64
    %v155 = vunpack.c.l.b16 %v65
    %v156 = vunpack.c.l.b16 %v66
    %v157 = vunpack.c.h.b16 %v66
    %v158 = vunpack.c.l.b16 %v67
    %v159 = vunpack.c.l.b16 %v68
    %v160 = vunpack.c.h.b16 %v68
    %v161 = vunpack.c.l.b16 %v69
    %v162 = vunpack.c.l.b16 %v70
    %v163 = vunpack.c.h.b16 %v70
    %v164 = vunpack.c.l.b16 %v71
    %v165 = vunpack.c.l.b16 %v72
    %v166 = vunpack.c.h.b16 %v72
    %v167 = vunpack.c.l.b16 %v73
    %v168 = vunpack.c.l.b16 %v74
    %v169 = vunpack.c.h.b16 %v74
    %v170 = vunpack.c.l.b16 %v75
    %v171 = vunpack.c.l.b16 %v76
    %v172 = vunpack.c.h.b16 %v76
    %v173 = vunpack.c.l.b16 %v77
    %v174 = vunpack.c.l.b16 %v78
    %v175 = vunpack.c.h.b16 %v78
    %v176 = vunpack.c.l.b16 %v79
    %v177 = vunpack.c.l.b16 %v80
    %v178 = vunpack.c.h.b16 %v80
    %v179 = vunpack.c.l.b16 %v81
    %v180 = vunpack.c.l.b16 %v82
    %v181 = vunpack.c.h.b16 %v82
    %v182 = vunpack.c.l.b16 %v83
    %v183 = vunpack.c.l.b16 %v84
    %v184 = vunpack.c.h.b16 %v84
    %v185 = vunpack.c.l.b16 %v85
    %v186 = vunpack.c.l.b16 %v86
    %v187 = vunpack.c.h.b16 %v86
    %v188 = vunpack.c.l.b16 %v87
    %v189 = vunpack.c.l.b16 %v88
    %v190 = vunpack.c.h.b16 %v88
    %v191 = vunpack.c.l.b16 %v89
    %v192 = vunpack.c.l.b16 %v90
    %v193 = vunpack.c.h.b16 %v90
    %v194 = vunpack.c.l.b16 %v91
    %v195 = vpack.c.b16 %v150, %v147
    %v196 = vpack.c.b16 %v151, %v148
    %v197 = vpack.c.b16 %v152, %v149
    %v198 = vpack.c.b16 %v156, %v153
    %v199 = vpack.c.b16 %v157, %v154
    %v200 = vpack.c.b16 %v158, %v155
    %v201 = vpack.c.b16 %v162, %v159
    %v202 = vpack.c.b16 %v163, %v160
    %v203 = vpack.c.b16 %v164, %v161
    %v204 = vpack.c.b16 %v168, %v165
    %v205 = vpack.c.b16 %v169, %v166
    %v206 = vpack.c.b16 %v170, %v167
    %v207 = vpack.c.b16 %v174, %v171
    %v208 = vpack.c.b16 %v175, %v172
    %v209 = vpack.c.b16 %v176, %v173
    %v210 = vpack.c.b16 %v180, %v177
    %v211 = vpack.c.b16 %v181, %v178
    %v212 = vpack.c.b16 %v182, %v179
    %v213 = vpack.c.b16 %v186, %v183
    %v214 = vpack.c.b16 %v187, %v184
    %v215 = vpack.c.b16 %v188, %v185
    %v216 = vpack.c.b16 %v192, %v189
    %v217 = vpack.c.b16 %v193, %v190
    %v218 = vpack.c.b16 %v194, %v191
    %243 = vmatprep.subr.bf16.mxu0 %v196
    %244 = vmatpush1.bf16.msra.mxu0 %v195
    %245 = vmatprep.subr.bf16.mxu0 %v199
    %246 = vmatpush1.bf16.msra.mxu0 %v198
    %247 = vmatprep.subr.bf16.mxu0 %v202
    %248 = vmatpush1.bf16.msra.mxu0 %v201
    %249 = vmatprep.subr.bf16.mxu0 %v205
    %250 = vmatpush1.bf16.msra.mxu0 %v204
    %251 = vmatprep.subr.bf16.mxu0 %v208
    %252 = vmatpush1.bf16.msra.mxu0 %v207
    %253 = vmatprep.subr.bf16.mxu0 %v211
    %254 = vmatpush1.bf16.msra.mxu0 %v210
    %255 = vmatprep.subr.bf16.mxu0 %v214
    %256 = vmatpush1.bf16.msra.mxu0 %v213
    %257 = vmatprep.subr.bf16.mxu0 %v217
    %258 = vmatpush1.bf16.msra.mxu0 %v216
    %259 = vmatprep.subr.bf16.mxu0 0
    %260 = vmatpush1.bf16.msra.mxu0 0
    %261 = vmatprep.subr.bf16.mxu0 0
    %262 = vmatpush1.bf16.msra.mxu0 0
    %263 = vmatprep.subr.bf16.mxu0 0
    %264 = vmatpush1.bf16.msra.mxu0 0
    %265 = vmatprep.subr.bf16.mxu0 0
    %266 = vmatpush1.bf16.msra.mxu0 0
    %267 = vmatprep.subr.bf16.mxu0 0
    %268 = vmatpush1.bf16.msra.mxu0 0
    %269 = vmatprep.subr.bf16.mxu0 0
    %270 = vmatpush1.bf16.msra.mxu0 0
    %271 = vmatprep.subr.bf16.mxu0 0
    %272 = vmatpush1.bf16.msra.mxu0 0
    %273 = vmatprep.subr.bf16.mxu0 0
    %274 = vmatpush1.bf16.msra.mxu0 0
    %275 = vmatprep.mubr.bf16.mxu0 0
    %276 = vmatmul.mubr.bf16.gmra.mrb[0].mxu0 %v113
    %v277 = vpop.f32.mrb[0].mxu0
    %v278 = vadd.f32 %v97, %v277
    %v279 = vpop.f32.mrb[0].mxu0
    %v280 = vadd.f32 %v101, %v279
    %v281 = vpop.f32.mrb[0].mxu0
    %v282 = vadd.f32 %v97, %v281
    %v283 = vpop.f32.mrb[0].mxu0
    %v284 = vadd.f32 %v101, %v283
    %285 = vdwg.mxu0
    %286 = vmatprep.subr.bf16.mxu0 0
    %287 = vmatpush1.bf16.msra.mxu0 %v197
    %288 = vmatprep.subr.bf16.mxu0 0
    %289 = vmatpush1.bf16.msra.mxu0 %v200
    %290 = vmatprep.subr.bf16.mxu0 0
    %291 = vmatpush1.bf16.msra.mxu0 %v203
    %292 = vmatprep.subr.bf16.mxu0 0
    %293 = vmatpush1.bf16.msra.mxu0 %v206
    %294 = vmatprep.subr.bf16.mxu0 0
    %295 = vmatpush1.bf16.msra.mxu0 %v209
    %296 = vmatprep.subr.bf16.mxu0 0
    %297 = vmatpush1.bf16.msra.mxu0 %v212
    %298 = vmatprep.subr.bf16.mxu0 0
    %299 = vmatpush1.bf16.msra.mxu0 %v215
    %300 = vmatprep.subr.bf16.mxu0 0
    %301 = vmatpush1.bf16.msra.mxu0 %v218
    %302 = vmatprep.subr.bf16.mxu0 0
    %303 = vmatpush1.bf16.msra.mxu0 0
    %304 = vmatprep.subr.bf16.mxu0 0
    %305 = vmatpush1.bf16.msra.mxu0 0
    %306 = vmatprep.subr.bf16.mxu0 0
    %307 = vmatpush1.bf16.msra.mxu0 0
    %308 = vmatprep.subr.bf16.mxu0 0
    %309 = vmatpush1.bf16.msra.mxu0 0
    %310 = vmatprep.subr.bf16.mxu0 0
    %311 = vmatpush1.bf16.msra.mxu0 0
    %312 = vmatprep.subr.bf16.mxu0 0
    %313 = vmatpush1.bf16.msra.mxu0 0
    %314 = vmatprep.subr.bf16.mxu0 0
    %315 = vmatpush1.bf16.msra.mxu0 0
    %316 = vmatprep.subr.bf16.mxu0 0
    %317 = vmatpush1.bf16.msra.mxu0 0
    %318 = vmatprep.mubr.bf16.mxu0 0
    %319 = vmatmul.mubr.bf16.gmra.mrb[0].mxu0 %v113
    %v320 = vpop.f32.mrb[0].mxu0
    %v321 = vadd.f32 %v105, %v320
    %v322 = vpop.f32.mrb[0].mxu0
    %v323 = vpop.f32.mrb[0].mxu0
    %v324 = vadd.f32 %v105, %v323
    %v325 = vpop.f32.mrb[0].mxu0
    %326 = vdwg.mxu0
    %v327 = vld [vmem:[%s1] sm:$0xff]
    %v328 = vld [vmem:[%s1 + $0x8] sm:$0xf]
    %v329 = vld [vmem:[%s1 + $0xc] sm:$0xff]
    %v330 = vld [vmem:[%s1 + $0x14] sm:$0xf]
    %v331 = vld [vmem:[%s4] sm:$0xf]
    %v332 = vld [vmem:[%s4 + $0x4] sm:$0xf]
    %v333 = vld [vmem:[%s4 + $0x8] sm:$0xf]
    %v334 = vld [vmem:[%s4 + $0xc] sm:$0xf]
    %v335 = vld [vmem:[%s4 + $0x10] sm:$0xf]
    %v336 = vld [vmem:[%s4 + $0x14] sm:$0xf]
    %v337 = vld [vmem:[%s4 + $0x18] sm:$0xf]
    %v338 = vld [vmem:[%s4 + $0x1c] sm:$0xf]
    %v339 = vld [vmem:[%s4 + $0x20] sm:$0xf]
    %v340 = vld [vmem:[%s4 + $0x24] sm:$0xf]
    %v341 = vld [vmem:[%s4 + $0x28] sm:$0xf]
    %v342 = vld [vmem:[%s4 + $0x2c] sm:$0xf]
    %v343 = vld [vmem:[%s4 + $0x30] sm:$0xf]
    %v344 = vld [vmem:[%s4 + $0x34] sm:$0xf]
    %v345 = vld [vmem:[%s4 + $0x38] sm:$0xf]
    %v346 = vld [vmem:[%s4 + $0x3c] sm:$0xf]
    %v347 = vld [vmem:[%s4 + $0x40] sm:$0xf]
    %v348 = vld [vmem:[%s4 + $0x44] sm:$0xf]
    %v349 = vld [vmem:[%s4 + $0x48] sm:$0xf]
    %v350 = vld [vmem:[%s4 + $0x4c] sm:$0xf]
    %v351 = vld [vmem:[%s4 + $0x50] sm:$0xf]
    %v352 = vld [vmem:[%s4 + $0x54] sm:$0xf]
    %v353 = vld [vmem:[%s4 + $0x58] sm:$0xf]
    %v354 = vld [vmem:[%s4 + $0x5c] sm:$0xf]
    %v355 = vld [vmem:[%s4 + $0x60] sm:$0xf]
    %v356 = vld [vmem:[%s4 + $0x64] sm:$0xf]
    %v357 = vld [vmem:[%s4 + $0x68] sm:$0xf]
    %v358 = vld [vmem:[%s4 + $0x6c] sm:$0xf]
    %v359 = vld [vmem:[%s4 + $0x70] sm:$0xf]
    %v360 = vld [vmem:[%s4 + $0x74] sm:$0xf]
    %v361 = vld [vmem:[%s4 + $0x78] sm:$0xf]
    %v362 = vld [vmem:[%s4 + $0x7c] sm:$0xf]
    %v363 = vld [vmem:[%s4 + $0x80] sm:$0xf]
    %v364 = vld [vmem:[%s4 + $0x84] sm:$0xf]
    %v365 = vld [vmem:[%s4 + $0x88] sm:$0xf]
    %v366 = vld [vmem:[%s4 + $0x8c] sm:$0xf]
    %v367 = vld [vmem:[%s4 + $0x90] sm:$0xf]
    %v368 = vld [vmem:[%s4 + $0x94] sm:$0xf]
    %v369 = vld [vmem:[%s4 + $0x98] sm:$0xf]
    %v370 = vld [vmem:[%s4 + $0x9c] sm:$0xf]
    %v371 = vld [vmem:[%s4 + $0xa0] sm:$0xf]
    %v372 = vld [vmem:[%s4 + $0xa4] sm:$0xf]
    %v373 = vld [vmem:[%s4 + $0xa8] sm:$0xf]
    %v374 = vld [vmem:[%s4 + $0xac] sm:$0xf]
    %v375 = vld [vmem:[%s4 + $0xb0] sm:$0xf]
    %v376 = vld [vmem:[%s4 + $0xb4] sm:$0xf]
    %v377 = vld [vmem:[%s4 + $0xb8] sm:$0xf]
    %v378 = vld [vmem:[%s4 + $0xbc] sm:$0xf]
    %v379 = vld [vmem:[%s5] sm:$0x1]
    %v381 = vlaneseq
    %v382 = vshrl.u32 %v381, 7
    %v383 = vsub.s32 0, %v382
    %v384 = vrot.slane %v379, %v383
    %v390 = vunpack.c.l.b16 %v327
    %v391 = vunpack.c.h.b16 %v327
    %v392 = vunpack.c.l.b16 %v328
    %v393 = vunpack.c.l.b16 %v329
    %v394 = vunpack.c.h.b16 %v329
    %v395 = vunpack.c.l.b16 %v330
    %v396 = vpack.c.b16 %v393, %v390
    %v397 = vpack.c.b16 %v394, %v391
    %v398 = vpack.c.b16 %v395, %v392
    %v450 = vunpack.c.l.b16 %v331
    %v451 = vunpack.c.l.b16 %v332
    %v452 = vunpack.c.l.b16 %v333
    %v453 = vunpack.c.l.b16 %v334
    %v454 = vunpack.c.l.b16 %v335
    %v455 = vunpack.c.l.b16 %v336
    %v456 = vunpack.c.l.b16 %v337
    %v457 = vunpack.c.l.b16 %v338
    %v458 = vunpack.c.l.b16 %v339
    %v459 = vunpack.c.l.b16 %v340
    %v460 = vunpack.c.l.b16 %v341
    %v461 = vunpack.c.l.b16 %v342
    %v462 = vunpack.c.l.b16 %v343
    %v463 = vunpack.c.l.b16 %v344
    %v464 = vunpack.c.l.b16 %v345
    %v465 = vunpack.c.l.b16 %v346
    %v466 = vunpack.c.l.b16 %v347
    %v467 = vunpack.c.l.b16 %v348
    %v468 = vunpack.c.l.b16 %v349
    %v469 = vunpack.c.l.b16 %v350
    %v470 = vunpack.c.l.b16 %v351
    %v471 = vunpack.c.l.b16 %v352
    %v472 = vunpack.c.l.b16 %v353
    %v473 = vunpack.c.l.b16 %v354
    %v474 = vunpack.c.l.b16 %v355
    %v475 = vunpack.c.l.b16 %v356
    %v476 = vunpack.c.l.b16 %v357
    %v477 = vunpack.c.l.b16 %v358
    %v478 = vunpack.c.l.b16 %v359
    %v479 = vunpack.c.l.b16 %v360
    %v480 = vunpack.c.l.b16 %v361
    %v481 = vunpack.c.l.b16 %v362
    %v482 = vunpack.c.l.b16 %v363
    %v483 = vunpack.c.l.b16 %v364
    %v484 = vunpack.c.l.b16 %v365
    %v485 = vunpack.c.l.b16 %v366
    %v486 = vunpack.c.l.b16 %v367
    %v487 = vunpack.c.l.b16 %v368
    %v488 = vunpack.c.l.b16 %v369
    %v489 = vunpack.c.l.b16 %v370
    %v490 = vunpack.c.l.b16 %v371
    %v491 = vunpack.c.l.b16 %v372
    %v492 = vunpack.c.l.b16 %v373
    %v493 = vunpack.c.l.b16 %v374
    %v494 = vunpack.c.l.b16 %v375
    %v495 = vunpack.c.l.b16 %v376
    %v496 = vunpack.c.l.b16 %v377
    %v497 = vunpack.c.l.b16 %v378
    %v498 = vpack.c.b16 %v451, %v450
    %v499 = vpack.c.b16 %v453, %v452
    %v500 = vpack.c.b16 %v455, %v454
    %v501 = vpack.c.b16 %v457, %v456
    %v502 = vpack.c.b16 %v459, %v458
    %v503 = vpack.c.b16 %v461, %v460
    %v504 = vpack.c.b16 %v463, %v462
    %v505 = vpack.c.b16 %v465, %v464
    %v506 = vpack.c.b16 %v467, %v466
    %v507 = vpack.c.b16 %v469, %v468
    %v508 = vpack.c.b16 %v471, %v470
    %v509 = vpack.c.b16 %v473, %v472
    %v510 = vpack.c.b16 %v475, %v474
    %v511 = vpack.c.b16 %v477, %v476
    %v512 = vpack.c.b16 %v479, %v478
    %v513 = vpack.c.b16 %v481, %v480
    %v514 = vpack.c.b16 %v483, %v482
    %v515 = vpack.c.b16 %v485, %v484
    %v516 = vpack.c.b16 %v487, %v486
    %v517 = vpack.c.b16 %v489, %v488
    %v518 = vpack.c.b16 %v491, %v490
    %v519 = vpack.c.b16 %v493, %v492
    %v520 = vpack.c.b16 %v495, %v494
    %v521 = vpack.c.b16 %v497, %v496
    %546 = vmatprep.subr.bf16.mxu0 0
    %547 = vmatpush1.bf16.msra.mxu0 %v498
    %548 = vmatprep.subr.bf16.mxu0 0
    %549 = vmatpush1.bf16.msra.mxu0 %v499
    %550 = vmatprep.subr.bf16.mxu0 0
    %551 = vmatpush1.bf16.msra.mxu0 %v500
    %552 = vmatprep.subr.bf16.mxu0 0
    %553 = vmatpush1.bf16.msra.mxu0 %v501
    %554 = vmatprep.subr.bf16.mxu0 0
    %555 = vmatpush1.bf16.msra.mxu0 %v502
    %556 = vmatprep.subr.bf16.mxu0 0
    %557 = vmatpush1.bf16.msra.mxu0 %v503
    %558 = vmatprep.subr.bf16.mxu0 0
    %559 = vmatpush1.bf16.msra.mxu0 %v504
    %560 = vmatprep.subr.bf16.mxu0 0
    %561 = vmatpush1.bf16.msra.mxu0 %v505
    %562 = vmatprep.subr.bf16.mxu0 0
    %563 = vmatpush1.bf16.msra.mxu0 %v506
    %564 = vmatprep.subr.bf16.mxu0 0
    %565 = vmatpush1.bf16.msra.mxu0 %v507
    %566 = vmatprep.subr.bf16.mxu0 0
    %567 = vmatpush1.bf16.msra.mxu0 %v508
    %568 = vmatprep.subr.bf16.mxu0 0
    %569 = vmatpush1.bf16.msra.mxu0 %v509
    %570 = vmatprep.subr.bf16.mxu0 0
    %571 = vmatpush1.bf16.msra.mxu0 %v510
    %572 = vmatprep.subr.bf16.mxu0 0
    %573 = vmatpush1.bf16.msra.mxu0 %v511
    %574 = vmatprep.subr.bf16.mxu0 0
    %575 = vmatpush1.bf16.msra.mxu0 %v512
    %576 = vmatprep.subr.bf16.mxu0 0
    %577 = vmatpush1.bf16.msra.mxu0 %v513
    %578 = vmatprep.mubr.bf16.mxu0 %v397
    %579 = vmatmul.mubr.bf16.gmra.mrb[0].mxu0 %v396
    %v580 = vpop.f32.mrb[0].mxu0
    %v581 = vadd.f32 %v384, %v580
    %v582 = vpop.f32.mrb[0].mxu0
    %v583 = vpop.f32.mrb[0].mxu0
    %v584 = vadd.f32 %v384, %v583
    %v585 = vpop.f32.mrb[0].mxu0
    %586 = vdwg.mxu0
    %587 = vmatprep.subr.bf16.mxu0 0
    %588 = vmatpush1.bf16.msra.mxu0 %v514
    %589 = vmatprep.subr.bf16.mxu0 0
    %590 = vmatpush1.bf16.msra.mxu0 %v515
    %591 = vmatprep.subr.bf16.mxu0 0
    %592 = vmatpush1.bf16.msra.mxu0 %v516
    %593 = vmatprep.subr.bf16.mxu0 0
    %594 = vmatpush1.bf16.msra.mxu0 %v517
    %595 = vmatprep.subr.bf16.mxu0 0
    %596 = vmatpush1.bf16.msra.mxu0 %v518
    %597 = vmatprep.subr.bf16.mxu0 0
    %598 = vmatpush1.bf16.msra.mxu0 %v519
    %599 = vmatprep.subr.bf16.mxu0 0
    %600 = vmatpush1.bf16.msra.mxu0 %v520
    %601 = vmatprep.subr.bf16.mxu0 0
    %602 = vmatpush1.bf16.msra.mxu0 %v521
    %603 = vmatprep.subr.bf16.mxu0 0
    %604 = vmatpush1.bf16.msra.mxu0 0
    %605 = vmatprep.subr.bf16.mxu0 0
    %606 = vmatpush1.bf16.msra.mxu0 0
    %607 = vmatprep.subr.bf16.mxu0 0
    %608 = vmatpush1.bf16.msra.mxu0 0
    %609 = vmatprep.subr.bf16.mxu0 0
    %610 = vmatpush1.bf16.msra.mxu0 0
    %611 = vmatprep.subr.bf16.mxu0 0
    %612 = vmatpush1.bf16.msra.mxu0 0
    %613 = vmatprep.subr.bf16.mxu0 0
    %614 = vmatpush1.bf16.msra.mxu0 0
    %615 = vmatprep.subr.bf16.mxu0 0
    %616 = vmatpush1.bf16.msra.mxu0 0
    %617 = vmatprep.subr.bf16.mxu0 0
    %618 = vmatpush1.bf16.msra.mxu0 0
    %619 = vmatprep.mubr.bf16.mxu0 0
    %620 = vmatmul.mubr.bf16.gmra.mrb[0].mxu0 %v398
    %v621 = vpop.f32.mrb[0].mxu0
    %v622 = vadd.f32 %v581, %v621
    %v623 = vpop.f32.mrb[0].mxu0
    %v624 = vpop.f32.mrb[0].mxu0
    %v625 = vadd.f32 %v584, %v624
    %v626 = vpop.f32.mrb[0].mxu0
    %627 = vdwg.mxu0
    %v628 = vmax.f32 %v278, 0.0
    %v629 = vmax.f32 %v280, 0.0
    %v630 = vmax.f32 %v321, 0.0
    %v631 = vmax.f32 %v282, 0.0
    %v632 = vmax.f32 %v284, 0.0
    %v633 = vmax.f32 %v324, 0.0
    %v634 = vmax.f32 %v622, 0.0
    %v635 = vmax.f32 %v625, 0.0
    %v636 = vadd.f32 %v628, %v629
    %vm637 = vcmask 261120
    %v638 = vsel %vm637, %v630, 0.0
    %v639 = vadd.f32 %v636, %v638
    %640 = vadd.xlane.f32.xlu0 %v639
    %v641 = vpop.xlane.xlu0 %640
    %v642 = vadd.f32 %v631, %v632
    %v643 = vsel %vm637, %v633, 0.0
    %v644 = vadd.f32 %v642, %v643
    %645 = vadd.xlane.f32.xlu0 %v644
    %v646 = vpop.xlane.xlu0 %645
    %vm647 = vcmask 523264
    %v648 = vsel %vm647, %v634, 0.0
    %649 = vadd.xlane.f32.xlu0 %v648
    %v650 = vpop.xlane.xlu0 %649
    %v651 = vsel %vm647, %v635, 0.0
    %652 = vadd.xlane.f32.xlu0 %v651
    %v653 = vpop.xlane.xlu0 %652
    %v654 = vadd.f32 %v641, %v650
    %v655 = vadd.f32 %v646, %v653
    %v656 = vmul.f32 %v628, %v628
    %v657 = vmul.f32 %v629, %v629
    %v658 = vmul.f32 %v630, %v630
    %v659 = vmul.f32 %v631, %v631
    %v660 = vmul.f32 %v632, %v632
    %v661 = vmul.f32 %v633, %v633
    %v662 = vadd.f32 %v656, %v657
    %v663 = vsel %vm637, %v658, 0.0
    %v664 = vadd.f32 %v662, %v663
    %665 = vadd.xlane.f32.xlu0 %v664
    %v666 = vpop.xlane.xlu0 %665
    %v667 = vadd.f32 %v659, %v660
    %v668 = vsel %vm637, %v661, 0.0
    %v669 = vadd.f32 %v667, %v668
    %670 = vadd.xlane.f32.xlu0 %v669
    %v671 = vpop.xlane.xlu0 %670
    %v672 = vmul.f32 %v634, %v634
    %v673 = vmul.f32 %v635, %v635
    %v674 = vsel %vm647, %v672, 0.0
    %675 = vadd.xlane.f32.xlu0 %v674
    %v676 = vpop.xlane.xlu0 %675
    %v677 = vsel %vm647, %v673, 0.0
    %678 = vadd.xlane.f32.xlu0 %v677
    %v679 = vpop.xlane.xlu0 %678
    %v680 = vadd.f32 %v666, %v676
    %v681 = vadd.f32 %v671, %v679
    %v682 = vmul.f32 %v654, 0.0028409092
    %v683 = vmul.f32 %v655, 0.0028409092
    %v684 = vmul.f32 %v680, 0.0028409092
    %v685 = vmul.f32 %v681, 0.0028409092
    %v686 = vmul.f32 %v682, %v682
    %v687 = vmul.f32 %v683, %v683
    %v688 = vsub.f32 %v684, %v686
    %v689 = vsub.f32 %v685, %v687
    %v690 = vmax.f32 %v688, 0.0
    %v691 = vmax.f32 %v689, 0.0
    %v692 = vadd.f32 %v690, 1e-05
    %v693 = vadd.f32 %v691, 1e-05
    %v694 = vrsqrt.pop %v692
    %v695 = vrsqrt.pop %v693
    %v696 = vsub.f32 %v628, %v682
    %v697 = vsub.f32 %v629, %v682
    %v698 = vsub.f32 %v630, %v682
    %v699 = vsub.f32 %v631, %v683
    %v700 = vsub.f32 %v632, %v683
    %v701 = vsub.f32 %v633, %v683
    %v702 = vmul.f32 %v696, %v694
    %v703 = vmul.f32 %v697, %v694
    %v704 = vmul.f32 %v698, %v694
    %v705 = vmul.f32 %v699, %v695
    %v706 = vmul.f32 %v700, %v695
    %v707 = vmul.f32 %v701, %v695
    %v708 = vld [vmem:[%s6] sm:$0x7]
    %v710 = vlaneseq
    %v711 = vshrl.u32 %v710, 7
    %v712 = vsub.s32 0, %v711
    %v713 = vrot.slane %v708, %v712
    %v714 = vlaneseq
    %v715 = vshrl.u32 %v714, 7
    %v716 = vsub.s32 1, %v715
    %v717 = vrot.slane %v708, %v716
    %v718 = vlaneseq
    %v719 = vshrl.u32 %v718, 7
    %v720 = vsub.s32 2, %v719
    %v721 = vrot.slane %v708, %v720
    %v725 = vmul.f32 %v702, %v713
    %v726 = vmul.f32 %v703, %v717
    %v727 = vmul.f32 %v704, %v721
    %v728 = vmul.f32 %v705, %v713
    %v729 = vmul.f32 %v706, %v717
    %v730 = vmul.f32 %v707, %v721
    %v731 = vld [vmem:[%s7] sm:$0x7]
    %v733 = vlaneseq
    %v734 = vshrl.u32 %v733, 7
    %v735 = vsub.s32 0, %v734
    %v736 = vrot.slane %v731, %v735
    %v737 = vlaneseq
    %v738 = vshrl.u32 %v737, 7
    %v739 = vsub.s32 1, %v738
    %v740 = vrot.slane %v731, %v739
    %v741 = vlaneseq
    %v742 = vshrl.u32 %v741, 7
    %v743 = vsub.s32 2, %v742
    %v744 = vrot.slane %v731, %v743
    %v748 = vadd.f32 %v725, %v736
    %v749 = vadd.f32 %v726, %v740
    %v750 = vadd.f32 %v727, %v744
    %v751 = vadd.f32 %v728, %v736
    %v752 = vadd.f32 %v729, %v740
    %v753 = vadd.f32 %v730, %v744
    %v754 = vmax.f32 %v748, 0.0
    %v755 = vmax.f32 %v749, 0.0
    %v756 = vmax.f32 %v750, 0.0
    %v757 = vmax.f32 %v751, 0.0
    %v758 = vmax.f32 %v752, 0.0
    %v759 = vmax.f32 %v753, 0.0
    %v760 = vsub.f32 %v634, %v682
    %v761 = vsub.f32 %v635, %v683
    %v762 = vmul.f32 %v760, %v694
    %v763 = vmul.f32 %v761, %v695
    %v764 = vld [vmem:[%s8] sm:$0x1]
    %v766 = vlaneseq
    %v767 = vshrl.u32 %v766, 7
    %v768 = vsub.s32 0, %v767
    %v769 = vrot.slane %v764, %v768
    %v771 = vmul.f32 %v762, %v769
    %v772 = vmul.f32 %v763, %v769
    %v773 = vld [vmem:[%s9] sm:$0x1]
    %v775 = vlaneseq
    %v776 = vshrl.u32 %v775, 7
    %v777 = vsub.s32 0, %v776
    %v778 = vrot.slane %v773, %v777
    %v780 = vadd.f32 %v771, %v778
    %v781 = vadd.f32 %v772, %v778
    %v782 = vmax.f32 %v780, 0.0
    %v783 = vmax.f32 %v781, 0.0
    %v784 = vpack.c.bf16 %v757, %v754
    %v785 = vpack.c.bf16 %v758, %v755
    %v786 = vpack.c.bf16 %v759, %v756
    %v787 = vld [vmem:[%s10] sm:$0xff]
    %v788 = vld [vmem:[%s10 + $0x8] sm:$0xff]
    %v789 = vld [vmem:[%s10 + $0x10] sm:$0xff]
    %v790 = vld [vmem:[%s10 + $0x18] sm:$0xff]
    %v791 = vld [vmem:[%s10 + $0x20] sm:$0xff]
    %v792 = vld [vmem:[%s10 + $0x28] sm:$0xff]
    %v793 = vld [vmem:[%s10 + $0x30] sm:$0xff]
    %v794 = vld [vmem:[%s10 + $0x38] sm:$0xff]
    %v795 = vld [vmem:[%s10 + $0x40] sm:$0xff]
    %v796 = vld [vmem:[%s10 + $0x48] sm:$0xff]
    %v797 = vld [vmem:[%s10 + $0x50] sm:$0xff]
    %v798 = vld [vmem:[%s10 + $0x58] sm:$0xff]
    %v799 = vld [vmem:[%s10 + $0x60] sm:$0xff]
    %v800 = vld [vmem:[%s10 + $0x68] sm:$0xff]
    %v801 = vld [vmem:[%s10 + $0x70] sm:$0xff]
    %v802 = vld [vmem:[%s10 + $0x78] sm:$0xff]
    %v803 = vld [vmem:[%s10 + $0x80] sm:$0xff]
    %v804 = vld [vmem:[%s10 + $0x88] sm:$0xff]
    %v805 = vld [vmem:[%s10 + $0x90] sm:$0xff]
    %v806 = vld [vmem:[%s10 + $0x98] sm:$0xff]
    %v807 = vld [vmem:[%s10 + $0xa0] sm:$0xff]
    %v808 = vld [vmem:[%s10 + $0xa8] sm:$0xff]
    %v809 = vld [vmem:[%s10 + $0xb0] sm:$0xff]
    %v810 = vld [vmem:[%s10 + $0xb8] sm:$0xff]
    %v811 = vld [vmem:[%s10 + $0xc0] sm:$0xff]
    %v812 = vld [vmem:[%s10 + $0xc8] sm:$0xff]
    %v813 = vld [vmem:[%s10 + $0xd0] sm:$0xff]
    %v814 = vld [vmem:[%s10 + $0xd8] sm:$0xff]
    %v815 = vld [vmem:[%s10 + $0xe0] sm:$0xff]
    %v816 = vld [vmem:[%s10 + $0xe8] sm:$0xff]
    %v817 = vld [vmem:[%s10 + $0xf0] sm:$0xff]
    %v818 = vld [vmem:[%s10 + $0xf8] sm:$0xff]
    %v819 = vld [vmem:[%s10 + $0x100] sm:$0xff]
    %v820 = vld [vmem:[%s10 + $0x108] sm:$0xff]
    %v821 = vld [vmem:[%s10 + $0x110] sm:$0xff]
    %v822 = vld [vmem:[%s10 + $0x118] sm:$0xff]
    %v823 = vld [vmem:[%s10 + $0x120] sm:$0xff]
    %v824 = vld [vmem:[%s10 + $0x128] sm:$0xff]
    %v825 = vld [vmem:[%s10 + $0x130] sm:$0xff]
    %v826 = vld [vmem:[%s10 + $0x138] sm:$0xff]
    %v827 = vld [vmem:[%s10 + $0x140] sm:$0xff]
    %v828 = vld [vmem:[%s10 + $0x148] sm:$0xff]
    %v829 = vld [vmem:[%s10 + $0x150] sm:$0xff]
    %v830 = vld [vmem:[%s10 + $0x158] sm:$0xff]
    %v831 = vld [vmem:[%s10 + $0x160] sm:$0xff]
    %v832 = vld [vmem:[%s10 + $0x168] sm:$0xff]
    %v833 = vld [vmem:[%s10 + $0x170] sm:$0xff]
    %v834 = vld [vmem:[%s10 + $0x178] sm:$0xff]
    %v835 = vld [vmem:[%s10 + $0x180] sm:$0xff]
    %v836 = vld [vmem:[%s10 + $0x188] sm:$0xff]
    %v837 = vld [vmem:[%s10 + $0x190] sm:$0xff]
    %v838 = vld [vmem:[%s10 + $0x198] sm:$0xff]
    %v839 = vld [vmem:[%s10 + $0x1a0] sm:$0xff]
    %v840 = vld [vmem:[%s10 + $0x1a8] sm:$0xff]
    %v841 = vld [vmem:[%s10 + $0x1b0] sm:$0xff]
    %v842 = vld [vmem:[%s10 + $0x1b8] sm:$0xff]
    %v843 = vld [vmem:[%s10 + $0x1c0] sm:$0xff]
    %v844 = vld [vmem:[%s10 + $0x1c8] sm:$0xff]
    %v845 = vld [vmem:[%s10 + $0x1d0] sm:$0xff]
    %v846 = vld [vmem:[%s10 + $0x1d8] sm:$0xff]
    %v847 = vld [vmem:[%s10 + $0x1e0] sm:$0xff]
    %v848 = vld [vmem:[%s10 + $0x1e8] sm:$0xff]
    %v849 = vld [vmem:[%s10 + $0x1f0] sm:$0xff]
    %v850 = vld [vmem:[%s10 + $0x1f8] sm:$0xff]
    %v851 = vld [vmem:[%s10 + $0x200] sm:$0xff]
    %v852 = vld [vmem:[%s10 + $0x208] sm:$0xff]
    %v853 = vld [vmem:[%s10 + $0x210] sm:$0xff]
    %v854 = vld [vmem:[%s10 + $0x218] sm:$0xff]
    %v855 = vld [vmem:[%s10 + $0x220] sm:$0xff]
    %v856 = vld [vmem:[%s10 + $0x228] sm:$0xff]
    %v857 = vld [vmem:[%s10 + $0x230] sm:$0xff]
    %v858 = vld [vmem:[%s10 + $0x238] sm:$0xff]
    %v859 = vpack.c.bf16 %v783, %v782
    %v860 = vld [vmem:[%s11] sm:$0xff]
    %v861 = vld [vmem:[%s11 + $0x8] sm:$0xff]
    %v862 = vld [vmem:[%s11 + $0x10] sm:$0xff]
    %v863 = vld [vmem:[%s11 + $0x18] sm:$0xff]
    %v864 = vld [vmem:[%s11 + $0x20] sm:$0xff]
    %v865 = vld [vmem:[%s11 + $0x28] sm:$0xff]
    %v866 = vld [vmem:[%s11 + $0x30] sm:$0xff]
    %v867 = vld [vmem:[%s11 + $0x38] sm:$0xff]
    %v868 = vld [vmem:[%s11 + $0x40] sm:$0xff]
    %v869 = vld [vmem:[%s11 + $0x48] sm:$0xff]
    %v870 = vld [vmem:[%s11 + $0x50] sm:$0xff]
    %v871 = vld [vmem:[%s11 + $0x58] sm:$0xff]
    %v872 = vld [vmem:[%s11 + $0x60] sm:$0xff]
    %v873 = vld [vmem:[%s11 + $0x68] sm:$0xff]
    %v874 = vld [vmem:[%s11 + $0x70] sm:$0xff]
    %v875 = vld [vmem:[%s11 + $0x78] sm:$0xff]
    %v892 = vunpack.c.l.b16 %v860
    %v893 = vunpack.c.h.b16 %v860
    %v894 = vunpack.c.l.b16 %v861
    %v895 = vunpack.c.h.b16 %v861
    %v896 = vunpack.c.l.b16 %v862
    %v897 = vunpack.c.h.b16 %v862
    %v898 = vunpack.c.l.b16 %v863
    %v899 = vunpack.c.h.b16 %v863
    %v900 = vunpack.c.l.b16 %v864
    %v901 = vunpack.c.h.b16 %v864
    %v902 = vunpack.c.l.b16 %v865
    %v903 = vunpack.c.h.b16 %v865
    %v904 = vunpack.c.l.b16 %v866
    %v905 = vunpack.c.h.b16 %v866
    %v906 = vunpack.c.l.b16 %v867
    %v907 = vunpack.c.h.b16 %v867
    %v908 = vunpack.c.l.b16 %v868
    %v909 = vunpack.c.h.b16 %v868
    %v910 = vunpack.c.l.b16 %v869
    %v911 = vunpack.c.h.b16 %v869
    %v912 = vunpack.c.l.b16 %v870
    %v913 = vunpack.c.h.b16 %v870
    %v914 = vunpack.c.l.b16 %v871
    %v915 = vunpack.c.h.b16 %v871
    %v916 = vunpack.c.l.b16 %v872
    %v917 = vunpack.c.h.b16 %v872
    %v918 = vunpack.c.l.b16 %v873
    %v919 = vunpack.c.h.b16 %v873
    %v920 = vunpack.c.l.b16 %v874
    %v921 = vunpack.c.h.b16 %v874
    %v922 = vunpack.c.l.b16 %v875
    %v923 = vunpack.c.h.b16 %v875
    %v924 = vpack.c.b16 %v896, %v892
    %v925 = vpack.c.b16 %v897, %v893
    %v926 = vpack.c.b16 %v898, %v894
    %v927 = vpack.c.b16 %v899, %v895
    %v928 = vpack.c.b16 %v904, %v900
    %v929 = vpack.c.b16 %v905, %v901
    %v930 = vpack.c.b16 %v906, %v902
    %v931 = vpack.c.b16 %v907, %v903
    %v932 = vpack.c.b16 %v912, %v908
    %v933 = vpack.c.b16 %v913, %v909
    %v934 = vpack.c.b16 %v914, %v910
    %v935 = vpack.c.b16 %v915, %v911
    %v936 = vpack.c.b16 %v920, %v916
    %v937 = vpack.c.b16 %v921, %v917
    %v938 = vpack.c.b16 %v922, %v918
    %v939 = vpack.c.b16 %v923, %v919
    %v957 = vsel %vm647, %v859, 0
    %959 = vmatprep.subr.bf16.mxu0 %v925
    %960 = vmatpush1.bf16.msra.mxu0 %v924
    %961 = vmatprep.subr.bf16.mxu0 %v929
    %962 = vmatpush1.bf16.msra.mxu0 %v928
    %963 = vmatprep.subr.bf16.mxu0 %v933
    %964 = vmatpush1.bf16.msra.mxu0 %v932
    %965 = vmatprep.subr.bf16.mxu0 %v937
    %966 = vmatpush1.bf16.msra.mxu0 %v936
    %967 = vmatprep.subr.bf16.mxu0 0
    %968 = vmatpush1.bf16.msra.mxu0 0
    %969 = vmatprep.subr.bf16.mxu0 0
    %970 = vmatpush1.bf16.msra.mxu0 0
    %971 = vmatprep.subr.bf16.mxu0 0
    %972 = vmatpush1.bf16.msra.mxu0 0
    %973 = vmatprep.subr.bf16.mxu0 0
    %974 = vmatpush1.bf16.msra.mxu0 0
    %975 = vmatprep.subr.bf16.mxu0 0
    %976 = vmatpush1.bf16.msra.mxu0 0
    %977 = vmatprep.subr.bf16.mxu0 0
    %978 = vmatpush1.bf16.msra.mxu0 0
    %979 = vmatprep.subr.bf16.mxu0 0
    %980 = vmatpush1.bf16.msra.mxu0 0
    %981 = vmatprep.subr.bf16.mxu0 0
    %982 = vmatpush1.bf16.msra.mxu0 0
    %983 = vmatprep.subr.bf16.mxu0 0
    %984 = vmatpush1.bf16.msra.mxu0 0
    %985 = vmatprep.subr.bf16.mxu0 0
    %986 = vmatpush1.bf16.msra.mxu0 0
    %987 = vmatprep.subr.bf16.mxu0 0
    %988 = vmatpush1.bf16.msra.mxu0 0
    %989 = vmatprep.subr.bf16.mxu0 0
    %990 = vmatpush1.bf16.msra.mxu0 0
    %991 = vmatprep.mubr.bf16.mxu0 0
    %992 = vmatmul.mubr.bf16.gmra.mrb[0].mxu0 %v957
    %v993 = vpop.f32.mrb[0].mxu0
    %v994 = vadd.f32 0.0, %v993
    %v995 = vpop.f32.mrb[0].mxu0
    %v996 = vadd.f32 0.0, %v995
    %v997 = vpop.f32.mrb[0].mxu0
    %v998 = vadd.f32 0.0, %v997
    %v999 = vpop.f32.mrb[0].mxu0
    %v1000 = vadd.f32 0.0, %v999
    %1001 = vdwg.mxu0
    %1002 = vmatprep.subr.bf16.mxu0 %v927
    %1003 = vmatpush1.bf16.msra.mxu0 %v926
    %1004 = vmatprep.subr.bf16.mxu0 %v931
    %1005 = vmatpush1.bf16.msra.mxu0 %v930
    %1006 = vmatprep.subr.bf16.mxu0 %v935
    %1007 = vmatpush1.bf16.msra.mxu0 %v934
    %1008 = vmatprep.subr.bf16.mxu0 %v939
    %1009 = vmatpush1.bf16.msra.mxu0 %v938
    %1010 = vmatprep.subr.bf16.mxu0 0
    %1011 = vmatpush1.bf16.msra.mxu0 0
    %1012 = vmatprep.subr.bf16.mxu0 0
    %1013 = vmatpush1.bf16.msra.mxu0 0
    %1014 = vmatprep.subr.bf16.mxu0 0
    %1015 = vmatpush1.bf16.msra.mxu0 0
    %1016 = vmatprep.subr.bf16.mxu0 0
    %1017 = vmatpush1.bf16.msra.mxu0 0
    %1018 = vmatprep.subr.bf16.mxu0 0
    %1019 = vmatpush1.bf16.msra.mxu0 0
    %1020 = vmatprep.subr.bf16.mxu0 0
    %1021 = vmatpush1.bf16.msra.mxu0 0
    %1022 = vmatprep.subr.bf16.mxu0 0
    %1023 = vmatpush1.bf16.msra.mxu0 0
    %1024 = vmatprep.subr.bf16.mxu0 0
    %1025 = vmatpush1.bf16.msra.mxu0 0
    %1026 = vmatprep.subr.bf16.mxu0 0
    %1027 = vmatpush1.bf16.msra.mxu0 0
    %1028 = vmatprep.subr.bf16.mxu0 0
    %1029 = vmatpush1.bf16.msra.mxu0 0
    %1030 = vmatprep.subr.bf16.mxu0 0
    %1031 = vmatpush1.bf16.msra.mxu0 0
    %1032 = vmatprep.subr.bf16.mxu0 0
    %1033 = vmatpush1.bf16.msra.mxu0 0
    %1034 = vmatprep.mubr.bf16.mxu0 0
    %1035 = vmatmul.mubr.bf16.gmra.mrb[0].mxu0 %v957
    %v1036 = vpop.f32.mrb[0].mxu0
    %v1037 = vadd.f32 0.0, %v1036
    %v1038 = vpop.f32.mrb[0].mxu0
    %v1039 = vadd.f32 0.0, %v1038
    %v1040 = vpop.f32.mrb[0].mxu0
    %v1041 = vadd.f32 0.0, %v1040
    %v1042 = vpop.f32.mrb[0].mxu0
    %v1043 = vadd.f32 0.0, %v1042
    %1044 = vdwg.mxu0
    %v1117 = vunpack.c.l.b16 %v787
    %v1118 = vunpack.c.h.b16 %v787
    %v1119 = vunpack.c.l.b16 %v788
    %v1120 = vunpack.c.h.b16 %v788
    %v1121 = vunpack.c.l.b16 %v789
    %v1122 = vunpack.c.h.b16 %v789
    %v1123 = vunpack.c.l.b16 %v790
    %v1124 = vunpack.c.h.b16 %v790
    %v1125 = vunpack.c.l.b16 %v791
    %v1126 = vunpack.c.h.b16 %v791
    %v1127 = vunpack.c.l.b16 %v792
    %v1128 = vunpack.c.h.b16 %v792
    %v1129 = vunpack.c.l.b16 %v793
    %v1130 = vunpack.c.h.b16 %v793
    %v1131 = vunpack.c.l.b16 %v794
    %v1132 = vunpack.c.h.b16 %v794
    %v1133 = vunpack.c.l.b16 %v795
    %v1134 = vunpack.c.h.b16 %v795
    %v1135 = vunpack.c.l.b16 %v796
    %v1136 = vunpack.c.h.b16 %v796
    %v1137 = vunpack.c.l.b16 %v797
    %v1138 = vunpack.c.h.b16 %v797
    %v1139 = vunpack.c.l.b16 %v798
    %v1140 = vunpack.c.h.b16 %v798
    %v1141 = vunpack.c.l.b16 %v799
    %v1142 = vunpack.c.h.b16 %v799
    %v1143 = vunpack.c.l.b16 %v800
    %v1144 = vunpack.c.h.b16 %v800
    %v1145 = vunpack.c.l.b16 %v801
    %v1146 = vunpack.c.h.b16 %v801
    %v1147 = vunpack.c.l.b16 %v802
    %v1148 = vunpack.c.h.b16 %v802
    %v1149 = vunpack.c.l.b16 %v803
    %v1150 = vunpack.c.h.b16 %v803
    %v1151 = vunpack.c.l.b16 %v804
    %v1152 = vunpack.c.h.b16 %v804
    %v1153 = vunpack.c.l.b16 %v805
    %v1154 = vunpack.c.h.b16 %v805
    %v1155 = vunpack.c.l.b16 %v806
    %v1156 = vunpack.c.h.b16 %v806
    %v1157 = vunpack.c.l.b16 %v807
    %v1158 = vunpack.c.h.b16 %v807
    %v1159 = vunpack.c.l.b16 %v808
    %v1160 = vunpack.c.h.b16 %v808
    %v1161 = vunpack.c.l.b16 %v809
    %v1162 = vunpack.c.h.b16 %v809
    %v1163 = vunpack.c.l.b16 %v810
    %v1164 = vunpack.c.h.b16 %v810
    %v1165 = vunpack.c.l.b16 %v811
    %v1166 = vunpack.c.h.b16 %v811
    %v1167 = vunpack.c.l.b16 %v812
    %v1168 = vunpack.c.h.b16 %v812
    %v1169 = vunpack.c.l.b16 %v813
    %v1170 = vunpack.c.h.b16 %v813
    %v1171 = vunpack.c.l.b16 %v814
    %v1172 = vunpack.c.h.b16 %v814
    %v1173 = vunpack.c.l.b16 %v815
    %v1174 = vunpack.c.h.b16 %v815
    %v1175 = vunpack.c.l.b16 %v816
    %v1176 = vunpack.c.h.b16 %v816
    %v1177 = vunpack.c.l.b16 %v817
    %v1178 = vunpack.c.h.b16 %v817
    %v1179 = vunpack.c.l.b16 %v818
    %v1180 = vunpack.c.h.b16 %v818
    %v1181 = vunpack.c.l.b16 %v819
    %v1182 = vunpack.c.h.b16 %v819
    %v1183 = vunpack.c.l.b16 %v820
    %v1184 = vunpack.c.h.b16 %v820
    %v1185 = vunpack.c.l.b16 %v821
    %v1186 = vunpack.c.h.b16 %v821
    %v1187 = vunpack.c.l.b16 %v822
    %v1188 = vunpack.c.h.b16 %v822
    %v1189 = vunpack.c.l.b16 %v823
    %v1190 = vunpack.c.h.b16 %v823
    %v1191 = vunpack.c.l.b16 %v824
    %v1192 = vunpack.c.h.b16 %v824
    %v1193 = vunpack.c.l.b16 %v825
    %v1194 = vunpack.c.h.b16 %v825
    %v1195 = vunpack.c.l.b16 %v826
    %v1196 = vunpack.c.h.b16 %v826
    %v1197 = vunpack.c.l.b16 %v827
    %v1198 = vunpack.c.h.b16 %v827
    %v1199 = vunpack.c.l.b16 %v828
    %v1200 = vunpack.c.h.b16 %v828
    %v1201 = vunpack.c.l.b16 %v829
    %v1202 = vunpack.c.h.b16 %v829
    %v1203 = vunpack.c.l.b16 %v830
    %v1204 = vunpack.c.h.b16 %v830
    %v1205 = vunpack.c.l.b16 %v831
    %v1206 = vunpack.c.h.b16 %v831
    %v1207 = vunpack.c.l.b16 %v832
    %v1208 = vunpack.c.h.b16 %v832
    %v1209 = vunpack.c.l.b16 %v833
    %v1210 = vunpack.c.h.b16 %v833
    %v1211 = vunpack.c.l.b16 %v834
    %v1212 = vunpack.c.h.b16 %v834
    %v1213 = vunpack.c.l.b16 %v835
    %v1214 = vunpack.c.h.b16 %v835
    %v1215 = vunpack.c.l.b16 %v836
    %v1216 = vunpack.c.h.b16 %v836
    %v1217 = vunpack.c.l.b16 %v837
    %v1218 = vunpack.c.h.b16 %v837
    %v1219 = vunpack.c.l.b16 %v838
    %v1220 = vunpack.c.h.b16 %v838
    %v1221 = vunpack.c.l.b16 %v839
    %v1222 = vunpack.c.h.b16 %v839
    %v1223 = vunpack.c.l.b16 %v840
    %v1224 = vunpack.c.h.b16 %v840
    %v1225 = vunpack.c.l.b16 %v841
    %v1226 = vunpack.c.h.b16 %v841
    %v1227 = vunpack.c.l.b16 %v842
    %v1228 = vunpack.c.h.b16 %v842
    %v1229 = vunpack.c.l.b16 %v843
    %v1230 = vunpack.c.h.b16 %v843
    %v1231 = vunpack.c.l.b16 %v844
    %v1232 = vunpack.c.h.b16 %v844
    %v1233 = vunpack.c.l.b16 %v845
    %v1234 = vunpack.c.h.b16 %v845
    %v1235 = vunpack.c.l.b16 %v846
    %v1236 = vunpack.c.h.b16 %v846
    %v1237 = vunpack.c.l.b16 %v847
    %v1238 = vunpack.c.h.b16 %v847
    %v1239 = vunpack.c.l.b16 %v848
    %v1240 = vunpack.c.h.b16 %v848
    %v1241 = vunpack.c.l.b16 %v849
    %v1242 = vunpack.c.h.b16 %v849
    %v1243 = vunpack.c.l.b16 %v850
    %v1244 = vunpack.c.h.b16 %v850
    %v1245 = vunpack.c.l.b16 %v851
    %v1246 = vunpack.c.h.b16 %v851
    %v1247 = vunpack.c.l.b16 %v852
    %v1248 = vunpack.c.h.b16 %v852
    %v1249 = vunpack.c.l.b16 %v853
    %v1250 = vunpack.c.h.b16 %v853
    %v1251 = vunpack.c.l.b16 %v854
    %v1252 = vunpack.c.h.b16 %v854
    %v1253 = vunpack.c.l.b16 %v855
    %v1254 = vunpack.c.h.b16 %v855
    %v1255 = vunpack.c.l.b16 %v856
    %v1256 = vunpack.c.h.b16 %v856
    %v1257 = vunpack.c.l.b16 %v857
    %v1258 = vunpack.c.h.b16 %v857
    %v1259 = vunpack.c.l.b16 %v858
    %v1260 = vunpack.c.h.b16 %v858
    %v1261 = vpack.c.b16 %v1121, %v1117
    %v1262 = vpack.c.b16 %v1122, %v1118
    %v1263 = vpack.c.b16 %v1123, %v1119
    %v1264 = vpack.c.b16 %v1124, %v1120
    %v1265 = vpack.c.b16 %v1129, %v1125
    %v1266 = vpack.c.b16 %v1130, %v1126
    %v1267 = vpack.c.b16 %v1131, %v1127
    %v1268 = vpack.c.b16 %v1132, %v1128
    %v1269 = vpack.c.b16 %v1137, %v1133
    %v1270 = vpack.c.b16 %v1138, %v1134
    %v1271 = vpack.c.b16 %v1139, %v1135
    %v1272 = vpack.c.b16 %v1140, %v1136
    %v1273 = vpack.c.b16 %v1145, %v1141
    %v1274 = vpack.c.b16 %v1146, %v1142
    %v1275 = vpack.c.b16 %v1147, %v1143
    %v1276 = vpack.c.b16 %v1148, %v1144
    %v1277 = vpack.c.b16 %v1153, %v1149
    %v1278 = vpack.c.b16 %v1154, %v1150
    %v1279 = vpack.c.b16 %v1155, %v1151
    %v1280 = vpack.c.b16 %v1156, %v1152
    %v1281 = vpack.c.b16 %v1161, %v1157
    %v1282 = vpack.c.b16 %v1162, %v1158
    %v1283 = vpack.c.b16 %v1163, %v1159
    %v1284 = vpack.c.b16 %v1164, %v1160
    %v1285 = vpack.c.b16 %v1169, %v1165
    %v1286 = vpack.c.b16 %v1170, %v1166
    %v1287 = vpack.c.b16 %v1171, %v1167
    %v1288 = vpack.c.b16 %v1172, %v1168
    %v1289 = vpack.c.b16 %v1177, %v1173
    %v1290 = vpack.c.b16 %v1178, %v1174
    %v1291 = vpack.c.b16 %v1179, %v1175
    %v1292 = vpack.c.b16 %v1180, %v1176
    %v1293 = vpack.c.b16 %v1185, %v1181
    %v1294 = vpack.c.b16 %v1186, %v1182
    %v1295 = vpack.c.b16 %v1187, %v1183
    %v1296 = vpack.c.b16 %v1188, %v1184
    %v1297 = vpack.c.b16 %v1193, %v1189
    %v1298 = vpack.c.b16 %v1194, %v1190
    %v1299 = vpack.c.b16 %v1195, %v1191
    %v1300 = vpack.c.b16 %v1196, %v1192
    %v1301 = vpack.c.b16 %v1201, %v1197
    %v1302 = vpack.c.b16 %v1202, %v1198
    %v1303 = vpack.c.b16 %v1203, %v1199
    %v1304 = vpack.c.b16 %v1204, %v1200
    %v1305 = vpack.c.b16 %v1209, %v1205
    %v1306 = vpack.c.b16 %v1210, %v1206
    %v1307 = vpack.c.b16 %v1211, %v1207
    %v1308 = vpack.c.b16 %v1212, %v1208
    %v1309 = vpack.c.b16 %v1217, %v1213
    %v1310 = vpack.c.b16 %v1218, %v1214
    %v1311 = vpack.c.b16 %v1219, %v1215
    %v1312 = vpack.c.b16 %v1220, %v1216
    %v1313 = vpack.c.b16 %v1225, %v1221
    %v1314 = vpack.c.b16 %v1226, %v1222
    %v1315 = vpack.c.b16 %v1227, %v1223
    %v1316 = vpack.c.b16 %v1228, %v1224
    %v1317 = vpack.c.b16 %v1233, %v1229
    %v1318 = vpack.c.b16 %v1234, %v1230
    %v1319 = vpack.c.b16 %v1235, %v1231
    %v1320 = vpack.c.b16 %v1236, %v1232
    %v1321 = vpack.c.b16 %v1241, %v1237
    %v1322 = vpack.c.b16 %v1242, %v1238
    %v1323 = vpack.c.b16 %v1243, %v1239
    %v1324 = vpack.c.b16 %v1244, %v1240
    %v1325 = vpack.c.b16 %v1249, %v1245
    %v1326 = vpack.c.b16 %v1250, %v1246
    %v1327 = vpack.c.b16 %v1251, %v1247
    %v1328 = vpack.c.b16 %v1252, %v1248
    %v1329 = vpack.c.b16 %v1257, %v1253
    %v1330 = vpack.c.b16 %v1258, %v1254
    %v1331 = vpack.c.b16 %v1259, %v1255
    %v1332 = vpack.c.b16 %v1260, %v1256
    %v1406 = vsel %vm637, %v786, 0
    %1408 = vmatprep.subr.bf16.mxu0 %v1262
    %1409 = vmatpush1.bf16.msra.mxu0 %v1261
    %1410 = vmatprep.subr.bf16.mxu0 %v1266
    %1411 = vmatpush1.bf16.msra.mxu0 %v1265
    %1412 = vmatprep.subr.bf16.mxu0 %v1270
    %1413 = vmatpush1.bf16.msra.mxu0 %v1269
    %1414 = vmatprep.subr.bf16.mxu0 %v1274
    %1415 = vmatpush1.bf16.msra.mxu0 %v1273
    %1416 = vmatprep.subr.bf16.mxu0 %v1278
    %1417 = vmatpush1.bf16.msra.mxu0 %v1277
    %1418 = vmatprep.subr.bf16.mxu0 %v1282
    %1419 = vmatpush1.bf16.msra.mxu0 %v1281
    %1420 = vmatprep.subr.bf16.mxu0 %v1286
    %1421 = vmatpush1.bf16.msra.mxu0 %v1285
    %1422 = vmatprep.subr.bf16.mxu0 %v1290
    %1423 = vmatpush1.bf16.msra.mxu0 %v1289
    %1424 = vmatprep.subr.bf16.mxu0 %v1294
    %1425 = vmatpush1.bf16.msra.mxu0 %v1293
    %1426 = vmatprep.subr.bf16.mxu0 %v1298
    %1427 = vmatpush1.bf16.msra.mxu0 %v1297
    %1428 = vmatprep.subr.bf16.mxu0 %v1302
    %1429 = vmatpush1.bf16.msra.mxu0 %v1301
    %1430 = vmatprep.subr.bf16.mxu0 %v1306
    %1431 = vmatpush1.bf16.msra.mxu0 %v1305
    %1432 = vmatprep.subr.bf16.mxu0 %v1310
    %1433 = vmatpush1.bf16.msra.mxu0 %v1309
    %1434 = vmatprep.subr.bf16.mxu0 %v1314
    %1435 = vmatpush1.bf16.msra.mxu0 %v1313
    %1436 = vmatprep.subr.bf16.mxu0 %v1318
    %1437 = vmatpush1.bf16.msra.mxu0 %v1317
    %1438 = vmatprep.subr.bf16.mxu0 %v1322
    %1439 = vmatpush1.bf16.msra.mxu0 %v1321
    %1440 = vmatprep.mubr.bf16.mxu0 %v785
    %1441 = vmatmul.mubr.bf16.gmra.mrb[0].mxu0 %v784
    %v1442 = vpop.f32.mrb[0].mxu0
    %v1443 = vadd.f32 %v994, %v1442
    %v1444 = vpop.f32.mrb[0].mxu0
    %v1445 = vadd.f32 %v996, %v1444
    %v1446 = vpop.f32.mrb[0].mxu0
    %v1447 = vadd.f32 %v998, %v1446
    %v1448 = vpop.f32.mrb[0].mxu0
    %v1449 = vadd.f32 %v1000, %v1448
    %1450 = vdwg.mxu0
    %1451 = vmatprep.subr.bf16.mxu0 %v1326
    %1452 = vmatpush1.bf16.msra.mxu0 %v1325
    %1453 = vmatprep.subr.bf16.mxu0 %v1330
    %1454 = vmatpush1.bf16.msra.mxu0 %v1329
    %1455 = vmatprep.subr.bf16.mxu0 0
    %1456 = vmatpush1.bf16.msra.mxu0 0
    %1457 = vmatprep.subr.bf16.mxu0 0
    %1458 = vmatpush1.bf16.msra.mxu0 0
    %1459 = vmatprep.subr.bf16.mxu0 0
    %1460 = vmatpush1.bf16.msra.mxu0 0
    %1461 = vmatprep.subr.bf16.mxu0 0
    %1462 = vmatpush1.bf16.msra.mxu0 0
    %1463 = vmatprep.subr.bf16.mxu0 0
    %1464 = vmatpush1.bf16.msra.mxu0 0
    %1465 = vmatprep.subr.bf16.mxu0 0
    %1466 = vmatpush1.bf16.msra.mxu0 0
    %1467 = vmatprep.subr.bf16.mxu0 0
    %1468 = vmatpush1.bf16.msra.mxu0 0
    %1469 = vmatprep.subr.bf16.mxu0 0
    %1470 = vmatpush1.bf16.msra.mxu0 0
    %1471 = vmatprep.subr.bf16.mxu0 0
    %1472 = vmatpush1.bf16.msra.mxu0 0
    %1473 = vmatprep.subr.bf16.mxu0 0
    %1474 = vmatpush1.bf16.msra.mxu0 0
    %1475 = vmatprep.subr.bf16.mxu0 0
    %1476 = vmatpush1.bf16.msra.mxu0 0
    %1477 = vmatprep.subr.bf16.mxu0 0
    %1478 = vmatpush1.bf16.msra.mxu0 0
    %1479 = vmatprep.subr.bf16.mxu0 0
    %1480 = vmatpush1.bf16.msra.mxu0 0
    %1481 = vmatprep.subr.bf16.mxu0 0
    %1482 = vmatpush1.bf16.msra.mxu0 0
    %1483 = vmatprep.mubr.bf16.mxu0 0
    %1484 = vmatmul.mubr.bf16.gmra.mrb[0].mxu0 %v1406
    %v1485 = vpop.f32.mrb[0].mxu0
    %v1486 = vadd.f32 %v1443, %v1485
    %v1487 = vpop.f32.mrb[0].mxu0
    %v1488 = vadd.f32 %v1445, %v1487
    %v1489 = vpop.f32.mrb[0].mxu0
    %v1490 = vadd.f32 %v1447, %v1489
    %v1491 = vpop.f32.mrb[0].mxu0
    %v1492 = vadd.f32 %v1449, %v1491
    %1493 = vdwg.mxu0
    %1494 = vmatprep.subr.bf16.mxu0 %v1264
    %1495 = vmatpush1.bf16.msra.mxu0 %v1263
    %1496 = vmatprep.subr.bf16.mxu0 %v1268
    %1497 = vmatpush1.bf16.msra.mxu0 %v1267
    %1498 = vmatprep.subr.bf16.mxu0 %v1272
    %1499 = vmatpush1.bf16.msra.mxu0 %v1271
    %1500 = vmatprep.subr.bf16.mxu0 %v1276
    %1501 = vmatpush1.bf16.msra.mxu0 %v1275
    %1502 = vmatprep.subr.bf16.mxu0 %v1280
    %1503 = vmatpush1.bf16.msra.mxu0 %v1279
    %1504 = vmatprep.subr.bf16.mxu0 %v1284
    %1505 = vmatpush1.bf16.msra.mxu0 %v1283
    %1506 = vmatprep.subr.bf16.mxu0 %v1288
    %1507 = vmatpush1.bf16.msra.mxu0 %v1287
    %1508 = vmatprep.subr.bf16.mxu0 %v1292
    %1509 = vmatpush1.bf16.msra.mxu0 %v1291
    %1510 = vmatprep.subr.bf16.mxu0 %v1296
    %1511 = vmatpush1.bf16.msra.mxu0 %v1295
    %1512 = vmatprep.subr.bf16.mxu0 %v1300
    %1513 = vmatpush1.bf16.msra.mxu0 %v1299
    %1514 = vmatprep.subr.bf16.mxu0 %v1304
    %1515 = vmatpush1.bf16.msra.mxu0 %v1303
    %1516 = vmatprep.subr.bf16.mxu0 %v1308
    %1517 = vmatpush1.bf16.msra.mxu0 %v1307
    %1518 = vmatprep.subr.bf16.mxu0 %v1312
    %1519 = vmatpush1.bf16.msra.mxu0 %v1311
    %1520 = vmatprep.subr.bf16.mxu0 %v1316
    %1521 = vmatpush1.bf16.msra.mxu0 %v1315
    %1522 = vmatprep.subr.bf16.mxu0 %v1320
    %1523 = vmatpush1.bf16.msra.mxu0 %v1319
    %1524 = vmatprep.subr.bf16.mxu0 %v1324
    %1525 = vmatpush1.bf16.msra.mxu0 %v1323
    %1526 = vmatprep.mubr.bf16.mxu0 %v785
    %1527 = vmatmul.mubr.bf16.gmra.mrb[0].mxu0 %v784
    %v1528 = vpop.f32.mrb[0].mxu0
    %v1529 = vadd.f32 %v1037, %v1528
    %v1530 = vpop.f32.mrb[0].mxu0
    %v1531 = vadd.f32 %v1039, %v1530
    %v1532 = vpop.f32.mrb[0].mxu0
    %v1533 = vadd.f32 %v1041, %v1532
    %v1534 = vpop.f32.mrb[0].mxu0
    %v1535 = vadd.f32 %v1043, %v1534
    %1536 = vdwg.mxu0
    %1537 = vmatprep.subr.bf16.mxu0 %v1328
    %1538 = vmatpush1.bf16.msra.mxu0 %v1327
    %1539 = vmatprep.subr.bf16.mxu0 %v1332
    %1540 = vmatpush1.bf16.msra.mxu0 %v1331
    %1541 = vmatprep.subr.bf16.mxu0 0
    %1542 = vmatpush1.bf16.msra.mxu0 0
    %1543 = vmatprep.subr.bf16.mxu0 0
    %1544 = vmatpush1.bf16.msra.mxu0 0
    %1545 = vmatprep.subr.bf16.mxu0 0
    %1546 = vmatpush1.bf16.msra.mxu0 0
    %1547 = vmatprep.subr.bf16.mxu0 0
    %1548 = vmatpush1.bf16.msra.mxu0 0
    %1549 = vmatprep.subr.bf16.mxu0 0
    %1550 = vmatpush1.bf16.msra.mxu0 0
    %1551 = vmatprep.subr.bf16.mxu0 0
    %1552 = vmatpush1.bf16.msra.mxu0 0
    %1553 = vmatprep.subr.bf16.mxu0 0
    %1554 = vmatpush1.bf16.msra.mxu0 0
    %1555 = vmatprep.subr.bf16.mxu0 0
    %1556 = vmatpush1.bf16.msra.mxu0 0
    %1557 = vmatprep.subr.bf16.mxu0 0
    %1558 = vmatpush1.bf16.msra.mxu0 0
    %1559 = vmatprep.subr.bf16.mxu0 0
    %1560 = vmatpush1.bf16.msra.mxu0 0
    %1561 = vmatprep.subr.bf16.mxu0 0
    %1562 = vmatpush1.bf16.msra.mxu0 0
    %1563 = vmatprep.subr.bf16.mxu0 0
    %1564 = vmatpush1.bf16.msra.mxu0 0
    %1565 = vmatprep.subr.bf16.mxu0 0
    %1566 = vmatpush1.bf16.msra.mxu0 0
    %1567 = vmatprep.subr.bf16.mxu0 0
    %1568 = vmatpush1.bf16.msra.mxu0 0
    %1569 = vmatprep.mubr.bf16.mxu0 0
    %1570 = vmatmul.mubr.bf16.gmra.mrb[0].mxu0 %v1406
    %v1571 = vpop.f32.mrb[0].mxu0
    %v1572 = vadd.f32 %v1529, %v1571
    %v1573 = vpop.f32.mrb[0].mxu0
    %v1574 = vadd.f32 %v1531, %v1573
    %v1575 = vpop.f32.mrb[0].mxu0
    %v1576 = vadd.f32 %v1533, %v1575
    %v1577 = vpop.f32.mrb[0].mxu0
    %v1578 = vadd.f32 %v1535, %v1577
    %1579 = vdwg.mxu0
    %v1580 = vld [vmem:[%s12] sm:$0xf]
    %v1582 = vlaneseq
    %v1583 = vshrl.u32 %v1582, 7
    %v1584 = vsub.s32 0, %v1583
    %v1585 = vrot.slane %v1580, %v1584
    %v1586 = vlaneseq
    %v1587 = vshrl.u32 %v1586, 7
    %v1588 = vsub.s32 1, %v1587
    %v1589 = vrot.slane %v1580, %v1588
    %v1590 = vlaneseq
    %v1591 = vshrl.u32 %v1590, 7
    %v1592 = vsub.s32 2, %v1591
    %v1593 = vrot.slane %v1580, %v1592
    %v1594 = vlaneseq
    %v1595 = vshrl.u32 %v1594, 7
    %v1596 = vsub.s32 3, %v1595
    %v1597 = vrot.slane %v1580, %v1596
    %v1602 = vadd.f32 %v1486, %v1585
    %v1603 = vadd.f32 %v1488, %v1589
    %v1604 = vadd.f32 %v1572, %v1593
    %v1605 = vadd.f32 %v1574, %v1597
    %v1606 = vadd.f32 %v1490, %v1585
    %v1607 = vadd.f32 %v1492, %v1589
    %v1608 = vadd.f32 %v1576, %v1593
    %v1609 = vadd.f32 %v1578, %v1597
    %v1610 = vmax.f32 %v1602, 0.0
    %v1611 = vmax.f32 %v1603, 0.0
    %v1612 = vmax.f32 %v1604, 0.0
    %v1613 = vmax.f32 %v1605, 0.0
    %v1614 = vmax.f32 %v1606, 0.0
    %v1615 = vmax.f32 %v1607, 0.0
    %v1616 = vmax.f32 %v1608, 0.0
    %v1617 = vmax.f32 %v1609, 0.0
    %v1618 = vpack.c.bf16 %v1614, %v1610
    %v1619 = vpack.c.bf16 %v1615, %v1611
    %v1620 = vpack.c.bf16 %v1616, %v1612
    %v1621 = vpack.c.bf16 %v1617, %v1613
    %v1622 = vld [vmem:[%s13] sm:$0xf]
    %v1623 = vld [vmem:[%s13 + $0x4] sm:$0xf]
    %v1624 = vld [vmem:[%s13 + $0x8] sm:$0xf]
    %v1625 = vld [vmem:[%s13 + $0xc] sm:$0xf]
    %v1626 = vld [vmem:[%s13 + $0x10] sm:$0xf]
    %v1627 = vld [vmem:[%s13 + $0x14] sm:$0xf]
    %v1628 = vld [vmem:[%s13 + $0x18] sm:$0xf]
    %v1629 = vld [vmem:[%s13 + $0x1c] sm:$0xf]
    %v1630 = vld [vmem:[%s13 + $0x20] sm:$0xf]
    %v1631 = vld [vmem:[%s13 + $0x24] sm:$0xf]
    %v1632 = vld [vmem:[%s13 + $0x28] sm:$0xf]
    %v1633 = vld [vmem:[%s13 + $0x2c] sm:$0xf]
    %v1634 = vld [vmem:[%s13 + $0x30] sm:$0xf]
    %v1635 = vld [vmem:[%s13 + $0x34] sm:$0xf]
    %v1636 = vld [vmem:[%s13 + $0x38] sm:$0xf]
    %v1637 = vld [vmem:[%s13 + $0x3c] sm:$0xf]
    %v1638 = vld [vmem:[%s13 + $0x40] sm:$0xf]
    %v1639 = vld [vmem:[%s13 + $0x44] sm:$0xf]
    %v1640 = vld [vmem:[%s13 + $0x48] sm:$0xf]
    %v1641 = vld [vmem:[%s13 + $0x4c] sm:$0xf]
    %v1642 = vld [vmem:[%s13 + $0x50] sm:$0xf]
    %v1643 = vld [vmem:[%s13 + $0x54] sm:$0xf]
    %v1644 = vld [vmem:[%s13 + $0x58] sm:$0xf]
    %v1645 = vld [vmem:[%s13 + $0x5c] sm:$0xf]
    %v1646 = vld [vmem:[%s13 + $0x60] sm:$0xf]
    %v1647 = vld [vmem:[%s13 + $0x64] sm:$0xf]
    %v1648 = vld [vmem:[%s13 + $0x68] sm:$0xf]
    %v1649 = vld [vmem:[%s13 + $0x6c] sm:$0xf]
    %v1650 = vld [vmem:[%s13 + $0x70] sm:$0xf]
    %v1651 = vld [vmem:[%s13 + $0x74] sm:$0xf]
    %v1652 = vld [vmem:[%s13 + $0x78] sm:$0xf]
    %v1653 = vld [vmem:[%s13 + $0x7c] sm:$0xf]
    %v1654 = vld [vmem:[%s13 + $0x80] sm:$0xf]
    %v1655 = vld [vmem:[%s13 + $0x84] sm:$0xf]
    %v1656 = vld [vmem:[%s13 + $0x88] sm:$0xf]
    %v1657 = vld [vmem:[%s13 + $0x8c] sm:$0xf]
    %v1658 = vld [vmem:[%s13 + $0x90] sm:$0xf]
    %v1659 = vld [vmem:[%s13 + $0x94] sm:$0xf]
    %v1660 = vld [vmem:[%s13 + $0x98] sm:$0xf]
    %v1661 = vld [vmem:[%s13 + $0x9c] sm:$0xf]
    %v1662 = vld [vmem:[%s13 + $0xa0] sm:$0xf]
    %v1663 = vld [vmem:[%s13 + $0xa4] sm:$0xf]
    %v1664 = vld [vmem:[%s13 + $0xa8] sm:$0xf]
    %v1665 = vld [vmem:[%s13 + $0xac] sm:$0xf]
    %v1666 = vld [vmem:[%s13 + $0xb0] sm:$0xf]
    %v1667 = vld [vmem:[%s13 + $0xb4] sm:$0xf]
    %v1668 = vld [vmem:[%s13 + $0xb8] sm:$0xf]
    %v1669 = vld [vmem:[%s13 + $0xbc] sm:$0xf]
    %v1670 = vld [vmem:[%s13 + $0xc0] sm:$0xf]
    %v1671 = vld [vmem:[%s13 + $0xc4] sm:$0xf]
    %v1672 = vld [vmem:[%s13 + $0xc8] sm:$0xf]
    %v1673 = vld [vmem:[%s13 + $0xcc] sm:$0xf]
    %v1674 = vld [vmem:[%s13 + $0xd0] sm:$0xf]
    %v1675 = vld [vmem:[%s13 + $0xd4] sm:$0xf]
    %v1676 = vld [vmem:[%s13 + $0xd8] sm:$0xf]
    %v1677 = vld [vmem:[%s13 + $0xdc] sm:$0xf]
    %v1678 = vld [vmem:[%s13 + $0xe0] sm:$0xf]
    %v1679 = vld [vmem:[%s13 + $0xe4] sm:$0xf]
    %v1680 = vld [vmem:[%s13 + $0xe8] sm:$0xf]
    %v1681 = vld [vmem:[%s13 + $0xec] sm:$0xf]
    %v1682 = vld [vmem:[%s13 + $0xf0] sm:$0xf]
    %v1683 = vld [vmem:[%s13 + $0xf4] sm:$0xf]
    %v1684 = vld [vmem:[%s13 + $0xf8] sm:$0xf]
    %v1685 = vld [vmem:[%s13 + $0xfc] sm:$0xf]
    %v1686 = vld [vmem:[%s14] sm:$0x1]
    %v1688 = vlaneseq
    %v1689 = vshrl.u32 %v1688, 7
    %v1690 = vsub.s32 0, %v1689
    %v1691 = vrot.slane %v1686, %v1690
    %v1757 = vunpack.c.l.b16 %v1622
    %v1758 = vunpack.c.l.b16 %v1623
    %v1759 = vunpack.c.l.b16 %v1624
    %v1760 = vunpack.c.l.b16 %v1625
    %v1761 = vunpack.c.l.b16 %v1626
    %v1762 = vunpack.c.l.b16 %v1627
    %v1763 = vunpack.c.l.b16 %v1628
    %v1764 = vunpack.c.l.b16 %v1629
    %v1765 = vunpack.c.l.b16 %v1630
    %v1766 = vunpack.c.l.b16 %v1631
    %v1767 = vunpack.c.l.b16 %v1632
    %v1768 = vunpack.c.l.b16 %v1633
    %v1769 = vunpack.c.l.b16 %v1634
    %v1770 = vunpack.c.l.b16 %v1635
    %v1771 = vunpack.c.l.b16 %v1636
    %v1772 = vunpack.c.l.b16 %v1637
    %v1773 = vunpack.c.l.b16 %v1638
    %v1774 = vunpack.c.l.b16 %v1639
    %v1775 = vunpack.c.l.b16 %v1640
    %v1776 = vunpack.c.l.b16 %v1641
    %v1777 = vunpack.c.l.b16 %v1642
    %v1778 = vunpack.c.l.b16 %v1643
    %v1779 = vunpack.c.l.b16 %v1644
    %v1780 = vunpack.c.l.b16 %v1645
    %v1781 = vunpack.c.l.b16 %v1646
    %v1782 = vunpack.c.l.b16 %v1647
    %v1783 = vunpack.c.l.b16 %v1648
    %v1784 = vunpack.c.l.b16 %v1649
    %v1785 = vunpack.c.l.b16 %v1650
    %v1786 = vunpack.c.l.b16 %v1651
    %v1787 = vunpack.c.l.b16 %v1652
    %v1788 = vunpack.c.l.b16 %v1653
    %v1789 = vunpack.c.l.b16 %v1654
    %v1790 = vunpack.c.l.b16 %v1655
    %v1791 = vunpack.c.l.b16 %v1656
    %v1792 = vunpack.c.l.b16 %v1657
    %v1793 = vunpack.c.l.b16 %v1658
    %v1794 = vunpack.c.l.b16 %v1659
    %v1795 = vunpack.c.l.b16 %v1660
    %v1796 = vunpack.c.l.b16 %v1661
    %v1797 = vunpack.c.l.b16 %v1662
    %v1798 = vunpack.c.l.b16 %v1663
    %v1799 = vunpack.c.l.b16 %v1664
    %v1800 = vunpack.c.l.b16 %v1665
    %v1801 = vunpack.c.l.b16 %v1666
    %v1802 = vunpack.c.l.b16 %v1667
    %v1803 = vunpack.c.l.b16 %v1668
    %v1804 = vunpack.c.l.b16 %v1669
    %v1805 = vunpack.c.l.b16 %v1670
    %v1806 = vunpack.c.l.b16 %v1671
    %v1807 = vunpack.c.l.b16 %v1672
    %v1808 = vunpack.c.l.b16 %v1673
    %v1809 = vunpack.c.l.b16 %v1674
    %v1810 = vunpack.c.l.b16 %v1675
    %v1811 = vunpack.c.l.b16 %v1676
    %v1812 = vunpack.c.l.b16 %v1677
    %v1813 = vunpack.c.l.b16 %v1678
    %v1814 = vunpack.c.l.b16 %v1679
    %v1815 = vunpack.c.l.b16 %v1680
    %v1816 = vunpack.c.l.b16 %v1681
    %v1817 = vunpack.c.l.b16 %v1682
    %v1818 = vunpack.c.l.b16 %v1683
    %v1819 = vunpack.c.l.b16 %v1684
    %v1820 = vunpack.c.l.b16 %v1685
    %v1821 = vpack.c.b16 %v1758, %v1757
    %v1822 = vpack.c.b16 %v1760, %v1759
    %v1823 = vpack.c.b16 %v1762, %v1761
    %v1824 = vpack.c.b16 %v1764, %v1763
    %v1825 = vpack.c.b16 %v1766, %v1765
    %v1826 = vpack.c.b16 %v1768, %v1767
    %v1827 = vpack.c.b16 %v1770, %v1769
    %v1828 = vpack.c.b16 %v1772, %v1771
    %v1829 = vpack.c.b16 %v1774, %v1773
    %v1830 = vpack.c.b16 %v1776, %v1775
    %v1831 = vpack.c.b16 %v1778, %v1777
    %v1832 = vpack.c.b16 %v1780, %v1779
    %v1833 = vpack.c.b16 %v1782, %v1781
    %v1834 = vpack.c.b16 %v1784, %v1783
    %v1835 = vpack.c.b16 %v1786, %v1785
    %v1836 = vpack.c.b16 %v1788, %v1787
    %v1837 = vpack.c.b16 %v1790, %v1789
    %v1838 = vpack.c.b16 %v1792, %v1791
    %v1839 = vpack.c.b16 %v1794, %v1793
    %v1840 = vpack.c.b16 %v1796, %v1795
    %v1841 = vpack.c.b16 %v1798, %v1797
    %v1842 = vpack.c.b16 %v1800, %v1799
    %v1843 = vpack.c.b16 %v1802, %v1801
    %v1844 = vpack.c.b16 %v1804, %v1803
    %v1845 = vpack.c.b16 %v1806, %v1805
    %v1846 = vpack.c.b16 %v1808, %v1807
    %v1847 = vpack.c.b16 %v1810, %v1809
    %v1848 = vpack.c.b16 %v1812, %v1811
    %v1849 = vpack.c.b16 %v1814, %v1813
    %v1850 = vpack.c.b16 %v1816, %v1815
    %v1851 = vpack.c.b16 %v1818, %v1817
    %v1852 = vpack.c.b16 %v1820, %v1819
    %1885 = vmatprep.subr.bf16.mxu0 0
    %1886 = vmatpush1.bf16.msra.mxu0 %v1821
    %1887 = vmatprep.subr.bf16.mxu0 0
    %1888 = vmatpush1.bf16.msra.mxu0 %v1822
    %1889 = vmatprep.subr.bf16.mxu0 0
    %1890 = vmatpush1.bf16.msra.mxu0 %v1823
    %1891 = vmatprep.subr.bf16.mxu0 0
    %1892 = vmatpush1.bf16.msra.mxu0 %v1824
    %1893 = vmatprep.subr.bf16.mxu0 0
    %1894 = vmatpush1.bf16.msra.mxu0 %v1825
    %1895 = vmatprep.subr.bf16.mxu0 0
    %1896 = vmatpush1.bf16.msra.mxu0 %v1826
    %1897 = vmatprep.subr.bf16.mxu0 0
    %1898 = vmatpush1.bf16.msra.mxu0 %v1827
    %1899 = vmatprep.subr.bf16.mxu0 0
    %1900 = vmatpush1.bf16.msra.mxu0 %v1828
    %1901 = vmatprep.subr.bf16.mxu0 0
    %1902 = vmatpush1.bf16.msra.mxu0 %v1829
    %1903 = vmatprep.subr.bf16.mxu0 0
    %1904 = vmatpush1.bf16.msra.mxu0 %v1830
    %1905 = vmatprep.subr.bf16.mxu0 0
    %1906 = vmatpush1.bf16.msra.mxu0 %v1831
    %1907 = vmatprep.subr.bf16.mxu0 0
    %1908 = vmatpush1.bf16.msra.mxu0 %v1832
    %1909 = vmatprep.subr.bf16.mxu0 0
    %1910 = vmatpush1.bf16.msra.mxu0 %v1833
    %1911 = vmatprep.subr.bf16.mxu0 0
    %1912 = vmatpush1.bf16.msra.mxu0 %v1834
    %1913 = vmatprep.subr.bf16.mxu0 0
    %1914 = vmatpush1.bf16.msra.mxu0 %v1835
    %1915 = vmatprep.subr.bf16.mxu0 0
    %1916 = vmatpush1.bf16.msra.mxu0 %v1836
    %1917 = vmatprep.mubr.bf16.mxu0 %v1619
    %1918 = vmatmul.mubr.bf16.gmra.mrb[0].mxu0 %v1618
    %v1919 = vpop.f32.mrb[0].mxu0
    %v1920 = vadd.f32 %v1691, %v1919
    %v1921 = vpop.f32.mrb[0].mxu0
    %v1922 = vpop.f32.mrb[0].mxu0
    %v1923 = vadd.f32 %v1691, %v1922
    %v1924 = vpop.f32.mrb[0].mxu0
    %1925 = vdwg.mxu0
    %1926 = vmatprep.subr.bf16.mxu0 0
    %1927 = vmatpush1.bf16.msra.mxu0 %v1837
    %1928 = vmatprep.subr.bf16.mxu0 0
    %1929 = vmatpush1.bf16.msra.mxu0 %v1838
    %1930 = vmatprep.subr.bf16.mxu0 0
    %1931 = vmatpush1.bf16.msra.mxu0 %v1839
    %1932 = vmatprep.subr.bf16.mxu0 0
    %1933 = vmatpush1.bf16.msra.mxu0 %v1840
    %1934 = vmatprep.subr.bf16.mxu0 0
    %1935 = vmatpush1.bf16.msra.mxu0 %v1841
    %1936 = vmatprep.subr.bf16.mxu0 0
    %1937 = vmatpush1.bf16.msra.mxu0 %v1842
    %1938 = vmatprep.subr.bf16.mxu0 0
    %1939 = vmatpush1.bf16.msra.mxu0 %v1843
    %1940 = vmatprep.subr.bf16.mxu0 0
    %1941 = vmatpush1.bf16.msra.mxu0 %v1844
    %1942 = vmatprep.subr.bf16.mxu0 0
    %1943 = vmatpush1.bf16.msra.mxu0 %v1845
    %1944 = vmatprep.subr.bf16.mxu0 0
    %1945 = vmatpush1.bf16.msra.mxu0 %v1846
    %1946 = vmatprep.subr.bf16.mxu0 0
    %1947 = vmatpush1.bf16.msra.mxu0 %v1847
    %1948 = vmatprep.subr.bf16.mxu0 0
    %1949 = vmatpush1.bf16.msra.mxu0 %v1848
    %1950 = vmatprep.subr.bf16.mxu0 0
    %1951 = vmatpush1.bf16.msra.mxu0 %v1849
    %1952 = vmatprep.subr.bf16.mxu0 0
    %1953 = vmatpush1.bf16.msra.mxu0 %v1850
    %1954 = vmatprep.subr.bf16.mxu0 0
    %1955 = vmatpush1.bf16.msra.mxu0 %v1851
    %1956 = vmatprep.subr.bf16.mxu0 0
    %1957 = vmatpush1.bf16.msra.mxu0 %v1852
    %1958 = vmatprep.mubr.bf16.mxu0 %v1621
    %1959 = vmatmul.mubr.bf16.gmra.mrb[0].mxu0 %v1620
    %v1960 = vpop.f32.mrb[0].mxu0
    %v1961 = vadd.f32 %v1920, %v1960
    %v1962 = vpop.f32.mrb[0].mxu0
    %v1963 = vpop.f32.mrb[0].mxu0
    %v1964 = vadd.f32 %v1923, %v1963
    %v1965 = vpop.f32.mrb[0].mxu0
    %1966 = vdwg.mxu0
    %v1967 = vmax.f32 %v1961, 0.0
    %v1968 = vmax.f32 %v1964, 0.0
    %v1969 = vpack.c.bf16 %v1968, %v1967
    %v1970 = vld [vmem:[%s15] sm:$0xf]
    %v1971 = vld [vmem:[%s15 + $0x4] sm:$0xf]
    %v1972 = vld [vmem:[%s15 + $0x8] sm:$0xf]
    %v1973 = vld [vmem:[%s15 + $0xc] sm:$0xf]
    %v1974 = vld [vmem:[%s15 + $0x10] sm:$0xf]
    %v1975 = vld [vmem:[%s15 + $0x14] sm:$0xf]
    %v1976 = vld [vmem:[%s15 + $0x18] sm:$0xf]
    %v1977 = vld [vmem:[%s15 + $0x1c] sm:$0xf]
    %v1978 = vld [vmem:[%s15 + $0x20] sm:$0xf]
    %v1979 = vld [vmem:[%s15 + $0x24] sm:$0xf]
    %v1980 = vld [vmem:[%s15 + $0x28] sm:$0xf]
    %v1981 = vld [vmem:[%s15 + $0x2c] sm:$0xf]
    %v1982 = vld [vmem:[%s16] sm:$0x1]
    %v1984 = vlaneseq
    %v1985 = vshrl.u32 %v1984, 7
    %v1986 = vsub.s32 0, %v1985
    %v1987 = vrot.slane %v1982, %v1986
    %v2001 = vunpack.c.l.b16 %v1970
    %v2002 = vunpack.c.l.b16 %v1971
    %v2003 = vunpack.c.l.b16 %v1972
    %v2004 = vunpack.c.l.b16 %v1973
    %v2005 = vunpack.c.l.b16 %v1974
    %v2006 = vunpack.c.l.b16 %v1975
    %v2007 = vunpack.c.l.b16 %v1976
    %v2008 = vunpack.c.l.b16 %v1977
    %v2009 = vunpack.c.l.b16 %v1978
    %v2010 = vunpack.c.l.b16 %v1979
    %v2011 = vunpack.c.l.b16 %v1980
    %v2012 = vunpack.c.l.b16 %v1981
    %v2013 = vpack.c.b16 %v2002, %v2001
    %v2014 = vpack.c.b16 %v2004, %v2003
    %v2015 = vpack.c.b16 %v2006, %v2005
    %v2016 = vpack.c.b16 %v2008, %v2007
    %v2017 = vpack.c.b16 %v2010, %v2009
    %v2018 = vpack.c.b16 %v2012, %v2011
    %vm2025 = vcmask 785408
    %v2027 = vsel %vm2025, %v1969, 0
    %2029 = vmatprep.subr.bf16.mxu0 0
    %2030 = vmatpush1.bf16.msra.mxu0 %v2013
    %2031 = vmatprep.subr.bf16.mxu0 0
    %2032 = vmatpush1.bf16.msra.mxu0 %v2014
    %2033 = vmatprep.subr.bf16.mxu0 0
    %2034 = vmatpush1.bf16.msra.mxu0 %v2015
    %2035 = vmatprep.subr.bf16.mxu0 0
    %2036 = vmatpush1.bf16.msra.mxu0 %v2016
    %2037 = vmatprep.subr.bf16.mxu0 0
    %2038 = vmatpush1.bf16.msra.mxu0 %v2017
    %2039 = vmatprep.subr.bf16.mxu0 0
    %2040 = vmatpush1.bf16.msra.mxu0 %v2018
    %2041 = vmatprep.subr.bf16.mxu0 0
    %2042 = vmatpush1.bf16.msra.mxu0 0
    %2043 = vmatprep.subr.bf16.mxu0 0
    %2044 = vmatpush1.bf16.msra.mxu0 0
    %2045 = vmatprep.subr.bf16.mxu0 0
    %2046 = vmatpush1.bf16.msra.mxu0 0
    %2047 = vmatprep.subr.bf16.mxu0 0
    %2048 = vmatpush1.bf16.msra.mxu0 0
    %2049 = vmatprep.subr.bf16.mxu0 0
    %2050 = vmatpush1.bf16.msra.mxu0 0
    %2051 = vmatprep.subr.bf16.mxu0 0
    %2052 = vmatpush1.bf16.msra.mxu0 0
    %2053 = vmatprep.subr.bf16.mxu0 0
    %2054 = vmatpush1.bf16.msra.mxu0 0
    %2055 = vmatprep.subr.bf16.mxu0 0
    %2056 = vmatpush1.bf16.msra.mxu0 0
    %2057 = vmatprep.subr.bf16.mxu0 0
    %2058 = vmatpush1.bf16.msra.mxu0 0
    %2059 = vmatprep.subr.bf16.mxu0 0
    %2060 = vmatpush1.bf16.msra.mxu0 0
    %2061 = vmatprep.mubr.bf16.mxu0 0
    %2062 = vmatmul.mubr.bf16.gmra.mrb[0].mxu0 %v2027
    %v2063 = vpop.f32.mrb[0].mxu0
    %v2064 = vadd.f32 %v1987, %v2063
    %v2065 = vpop.f32.mrb[0].mxu0
    %v2066 = vpop.f32.mrb[0].mxu0
    %v2067 = vadd.f32 %v1987, %v2066
    %v2068 = vpop.f32.mrb[0].mxu0
    %2069 = vdwg.mxu0
    %2070 = vst [vmem:[#allocation2] sm:$0xff] %v2064
    %2071 = vst [vmem:[#allocation2 + $0x8] sm:$0xff] %v2067
    // Predicated region
    $region70: #{tpu_custom_call.1} parent=1 // pred_check
      _
    $region71: #{tpu_custom_call.1} parent=1 // pred_check_branch
      %2073 = sbr.rel (0) target = $region73
    $region72: #{tpu_custom_call.1} parent=1 // pred_region
      %s2075 = ssub.s32 256, 256
      %2076 = vsyncadd [#allocation3], %s2075
      %s2077 = sshll.u32 [#allocation2], 4
      %s2078 = int_to_ptr.vmem [resolvable:$true] %s2077
      %2083 = dma.vmem_to_hbm [thread:$0]  %s2078, 256, %s17, [#allocation3], 128, 128, 8
    $region73: #{tpu_custom_call.1} parent=1 // pred_fallthru
      _
    // Predicated region
    $region74: #{tpu_custom_call.1} parent=1 // pred_check
      _
    $region75: #{tpu_custom_call.1} parent=1 // pred_check_branch
      %2085 = sbr.rel (0) target = $region77
    $region76: #{tpu_custom_call.1} parent=1 // pred_region
      %2086 = dma.done [#allocation3], 256
    $region77: #{tpu_custom_call.1} parent=1 // pred_fallthru
      _
    %2087 = vsyncpa [#allocation3], 1

</llo_original>
